<compile_context>
chip_gen: v6e
topology: v6e:2x2x1
jax: 0.10.0
libtpu: 0.0.40
codegen_flags: <defaults>
</compile_context>

<pallas_src>
import jax
import jax.numpy as jnp
from jax import lax
from jax.experimental import pallas as pl
from jax.experimental.pallas import tpu as pltpu

EPS = 1e-5     # torch BatchNorm1d default eps
VPAD = 128     # lane-dense padding of the vocab / output axis
VCOL = 32      # padded vocab rows for the embedding table (>= vocab, multiple of 8)


def _round8(n):
    return ((n + 7) // 8) * 8


# ----------------------------- parameter packing -----------------------------

def prepare_kernel_params(params):
    """Pack all model parameters into one lane-padded f32 slab + static layout metadata."""
    emb = params["emb"]
    vocab, n_dim = emb.shape
    n_hidden = params["w1"].shape[1]
    assert vocab <= VCOL and n_hidden <= VPAD and params["w1"].shape[0] == 2 * n_dim

    entries = [
        # (name, array, read_rows, read_cols)  -- read_* is the in-kernel view shape
        ("emb", emb, VCOL, n_dim),
        ("w1a", params["w1"][:n_dim], n_dim, n_hidden),
        ("w1b", params["w1"][n_dim:], n_dim, n_hidden),
        ("w2a", params["w2"][:n_hidden], n_hidden, n_hidden),
        ("w2b", params["w2"][n_hidden:], n_hidden, n_hidden),
        ("w3a", params["w3"][:n_hidden], n_hidden, n_hidden),
        ("w3b", params["w3"][n_hidden:], n_hidden, n_hidden),
        ("w4", params["w4"], n_hidden, VPAD),
        ("g1", params["g1"].reshape(1, -1), 1, n_hidden),
        ("b1", params["b1"].reshape(1, -1), 1, n_hidden),
        ("g2", params["g2"].reshape(1, -1), 1, n_hidden),
        ("b2", params["b2"].reshape(1, -1), 1, n_hidden),
        ("g3", params["g3"].reshape(1, -1), 1, n_hidden),
        ("b3", params["b3"].reshape(1, -1), 1, n_hidden),
        ("b4", params["b4"].reshape(1, -1), 1, VPAD),
    ]

    layout, blocks, r = {}, [], 0
    for name, a, rd_rows, rd_cols in entries:
        alloc_rows = _round8(max(a.shape[0], rd_rows))
        blk = jnp.zeros((alloc_rows, VPAD), jnp.float32)
        blk = blk.at[: a.shape[0], : a.shape[1]].set(a.astype(jnp.float32))
        blocks.append(blk)
        layout[name] = (r, rd_rows, rd_cols)   # static Python ints
        r += alloc_rows

    slab = jnp.concatenate(blocks, axis=0)     # (264, 128) f32 for the default sizes
    meta = dict(vocab=vocab, n_dim=n_dim, n_hidden=n_hidden, layout=layout)
    return slab, meta


# ----------------------------- fused Pallas kernel ----------------------------

def _make_kernel(B, T, meta, compute_dtype):
    layout = meta["layout"]
    f32 = jnp.float32

    def rd(slab_ref, name):
        r, nr, nc = layout[name]
        return slab_ref[pl.ds(r, nr), pl.ds(0, nc)]

    def kernel(idx_ref, slab_ref, out_ref):
        def mm(a, w):
            # MXU matmul; optionally bf16 operands, always f32 accumulation.
            return jnp.dot(a.astype(compute_dtype), w.astype(compute_dtype),
                           preferred_element_type=f32)

        # --- Embedding gather: one-hot (T*B, VCOL) @ emb (VCOL, n_dim) on the MXU.
        #     Rows are t-major: time step t occupies rows [t*B, (t+1)*B).
        emb = rd(slab_ref, "emb")                                        # (VCOL, n_dim)
        tok_iota = lax.broadcasted_iota(jnp.int32, (T * B, VCOL), 1)
        onehot = (tok_iota == idx_ref[...]).astype(compute_dtype)        # (T*B, VCOL)
        x = jnp.dot(onehot, emb.astype(compute_dtype),
                    preferred_element_type=f32)                          # (T*B, n_dim)

        def level(a, t_lvl, wa, wb, g, b):
            # FlattenConsecutive(2) + Linear(no bias) + train-mode BatchNorm1d + Tanh.
            # `a` is (t_lvl*B, C) t-major, so pairing time steps (2k, 2k+1) is two static,
            # tile-aligned row-block slices; concat(a_e, a_o) @ [wa; wb] == a_e@wa + a_o@wb.
            hs = []
            for k in range(t_lvl // 2):
                a_even = a[(2 * k) * B:(2 * k + 1) * B, :]
                a_odd = a[(2 * k + 1) * B:(2 * k + 2) * B, :]
                hs.append(mm(a_even, wa) + mm(a_odd, wb))
            h = jnp.concatenate(hs, axis=0) if len(hs) > 1 else hs[0]    # (t_lvl//2*B, H) f32
            mean = jnp.mean(h, axis=0, keepdims=True)                    # stats over (B, T) rows
            d = h - mean
            var = jnp.mean(d * d, axis=0, keepdims=True)                 # biased 1/N (train mode)
            return jnp.tanh(g * (d * lax.rsqrt(var + EPS)) + b)

        a1 = level(x, T, rd(slab_ref, "w1a"), rd(slab_ref, "w1b"),
                   rd(slab_ref, "g1"), rd(slab_ref, "b1"))               # (T/2*B, H)
        a2 = level(a1, T // 2, rd(slab_ref, "w2a"), rd(slab_ref, "w2b"),
                   rd(slab_ref, "g2"), rd(slab_ref, "b2"))               # (T/4*B, H)
        a3 = level(a2, T // 4, rd(slab_ref, "w3a"), rd(slab_ref, "w3b"),
                   rd(slab_ref, "g3"), rd(slab_ref, "b3"))               # (B, H)

        # Final Linear(H, vocab) + bias, padded to 128 lanes -> unmasked lane-dense store.
        out_ref[...] = mm(a3, rd(slab_ref, "w4")) + rd(slab_ref, "b4")

    return kernel


# ----------------------------- wrapper ----------------------------------------

def makemore_forward(slab, meta, idx, *, compute_dtype=jnp.float32):
    """idx: (B, T=8) int32 -> logits (B, vocab) f32, one fused pallas_call."""
    B, T = idx.shape
    assert T == 8, "three FlattenConsecutive(2) stages -> context length must be 8"
    assert B % 8 == 0, "B must be a multiple of 8 for sublane-aligned blocks / unmasked stores"
    vocab, n_dim, n_hidden = meta["vocab"], meta["n_dim"], meta["n_hidden"]

    # t-major flattening so each time step is a contiguous, tile-aligned block of B rows.
    idx_col = jnp.transpose(idx).reshape(T * B, 1).astype(jnp.int32)

    # Advisory cost estimate for the XLA scheduler.
    in_bytes = 4 * (idx_col.size + slab.size)
    out_bytes = 4 * B * VPAD
    flops = 2 * T * B * VCOL * n_dim                      # one-hot gather matmul
    trans = 0
    c_in, t_lvl = n_dim, T
    for _ in range(3):
        rows = (t_lvl // 2) * B
        flops += 4 * rows * c_in * n_hidden               # two split-weight matmuls
        flops += 10 * rows * n_hidden                     # BN + scale/shift epilogue
        trans += 2 * rows * n_hidden                      # tanh + rsqrt
        c_in, t_lvl = n_hidden, t_lvl // 2
    flops += 2 * B * n_hidden * VPAD + B * VPAD           # final projection + bias
    ce = pl.CostEstimate(flops=flops, transcendentals=trans,
                         bytes_accessed=in_bytes + out_bytes)

    vmem = pl.BlockSpec(memory_space=pltpu.MemorySpace.VMEM)
    logits_pad = pl.pallas_call(
        _make_kernel(B, T, meta, compute_dtype),
        out_shape=jax.ShapeDtypeStruct((B, VPAD), jnp.float32),
        in_specs=[vmem, vmem],
        out_specs=vmem,
        cost_estimate=ce,
    )(idx_col, slab)
    return logits_pad[:, :vocab]


# ----------------------------- parameter init ---------------------------------

def init_params(key, vocab_size, n_dim, n_hidden):
    """Deterministic parameter init matching the torch module's shapes (weights stored (in,out))."""
    ks = jax.random.split(key, 8)

    def lin_init(k, fan_in, fan_out):
        bound = 1.0 / jnp.sqrt(jnp.float32(fan_in))
        return jax.random.uniform(k, (fan_in, fan_out), jnp.float32, -bound, bound)

    return {
        "emb": jax.random.normal(ks[0], (vocab_size, n_dim), jnp.float32),
        "w1": lin_init(ks[1], n_dim * 2, n_hidden),
        "g1": jnp.ones((n_hidden,), jnp.float32),
        "b1": jnp.zeros((n_hidden,), jnp.float32),
        "w2": lin_init(ks[2], n_hidden * 2, n_hidden),
        "g2": jnp.ones((n_hidden,), jnp.float32),
        "b2": jnp.zeros((n_hidden,), jnp.float32),
        "w3": lin_init(ks[3], n_hidden * 2, n_hidden),
        "g3": jnp.ones((n_hidden,), jnp.float32),
        "b3": jnp.zeros((n_hidden,), jnp.float32),
        "w4": lin_init(ks[4], n_hidden, vocab_size),
        "b4": jax.random.uniform(
            ks[5], (vocab_size,), jnp.float32,
            -1.0 / jnp.sqrt(jnp.float32(n_hidden)), 1.0 / jnp.sqrt(jnp.float32(n_hidden)),
        ),
    }


# ----------------------------- pure-JAX reference -----------------------------

def reference_forward(params, idx):
    B, T = idx.shape
    hp = lax.Precision.HIGHEST

    def bn_tanh(h, g, b):
        m = h.mean(0, keepdims=True)
        v = ((h - m) ** 2).mean(0, keepdims=True)
        return jnp.tanh(g * (h - m) / jnp.sqrt(v + EPS) + b)

    x = jnp.take(params["emb"], idx, axis=0).reshape(B * T // 2, -1)
    x = bn_tanh(jnp.dot(x, params["w1"], precision=hp), params["g1"], params["b1"])
    x = x.reshape(B * T // 4, -1)
    x = bn_tanh(jnp.dot(x, params["w2"], precision=hp), params["g2"], params["b2"])
    x = x.reshape(B, -1)
    x = bn_tanh(jnp.dot(x, params["w3"], precision=hp), params["g3"], params["b3"])
    return jnp.dot(x, params["w4"], precision=hp) + params["b4"]


# ----------------------------- main --------------------------------------------

if __name__ == "__main__":
    vocab_size, n_dim, n_hidden = 27, 8, 32
    B, T = 32, 8   # makemore's standard batch of 32 sequences of 8 chars; B is the matmul M dim

    key = jax.random.PRNGKey(0)
    k_params, k_idx = jax.random.split(key)
    params = init_params(k_params, vocab_size, n_dim, n_hidden)
    idx = jax.random.randint(k_idx, (B, T), 0, vocab_size, dtype=jnp.int32)

    slab, meta = prepare_kernel_params(params)

    fwd_f32 = jax.jit(lambda s, i: makemore_forward(s, meta, i))
    fwd_bf16 = jax.jit(lambda s, i: makemore_forward(s, meta, i, compute_dtype=jnp.bfloat16))

    logits = fwd_f32(slab, idx)
    jax.block_until_ready(logits)
    assert logits.shape == (B, vocab_size), logits.shape
    assert logits.dtype == jnp.float32

    ref = reference_forward(params, idx)
    err_f32 = float(jnp.max(jnp.abs(logits - ref)))
    # f32 operands: tight check — would expose any wrong time-pairing / BN / broadcast bug.
    assert err_f32 < 1e-3, f"f32 kernel mismatch vs reference: {err_f32}"

    # bf16 matmul operands (BN stats / tanh stay f32): loose check covers rounding only;
    # structural correctness is already established by the tight f32 check above.
    logits_bf16 = fwd_bf16(slab, idx)
    jax.block_until_ready(logits_bf16)
    err_bf16 = float(jnp.max(jnp.abs(logits_bf16 - ref)))
    assert err_bf16 < 2e-1, f"bf16-operand kernel mismatch vs reference: {err_bf16}"

    print("KERNEL_OK")
</pallas_src>

<mosaic_0001>
module attributes {stable_mosaic.version = 11 : i64} {
  func.func @kernel(%arg0: memref<256x1xi32, #tpu.memory_space<vmem>>, %arg1: memref<264x128xf32, #tpu.memory_space<vmem>>, %arg2: memref<32x128xf32, #tpu.memory_space<vmem>>) attributes {dimension_semantics = [], scalar_prefetch = 0 : i64, scratch_operands = 0 : i64, tpu.core_type = #tpu.core_type<tc>} {
    %c0 = arith.constant 0 : index
    %c0_0 = arith.constant 0 : index
    %0 = vector.load %arg1[%c0, %c0_0] : memref<264x128xf32, #tpu.memory_space<vmem>>, vector<32x8xf32>
    %1 = tpu.iota {dimensions = array<i32: 1>} : vector<256x32xi32>
    %c0_1 = arith.constant 0 : index
    %c0_2 = arith.constant 0 : index
    %2 = vector.load %arg0[%c0_1, %c0_2] : memref<256x1xi32, #tpu.memory_space<vmem>>, vector<256x1xi32>
    %3 = vector.broadcast %2 : vector<256x1xi32> to vector<256x32xi32>
    %4 = arith.cmpi eq, %1, %3 : vector<256x32xi32>
    %5 = arith.extui %4 : vector<256x32xi1> to vector<256x32xi32>
    %6 = arith.sitofp %5 : vector<256x32xi32> to vector<256x32xf32>
    %cst = arith.constant dense<0.000000e+00> : vector<256x8xf32>
    %7 = tpu.matmul %6, %0, %cst {dimension_numbers = #tpu.dot_dimension_numbers<[1], [0], [0], [1], [0, 0, 1, 1], [], []>} : vector<256x32xf32>, vector<32x8xf32>, vector<256x8xf32> -> vector<256x8xf32>
    %c32 = arith.constant 32 : index
    %c0_3 = arith.constant 0 : index
    %8 = vector.load %arg1[%c32, %c0_3] : memref<264x128xf32, #tpu.memory_space<vmem>>, vector<8x32xf32>
    %c40 = arith.constant 40 : index
    %c0_4 = arith.constant 0 : index
    %9 = vector.load %arg1[%c40, %c0_4] : memref<264x128xf32, #tpu.memory_space<vmem>>, vector<8x32xf32>
    %c208 = arith.constant 208 : index
    %c0_5 = arith.constant 0 : index
    %10 = vector.load %arg1[%c208, %c0_5] : memref<264x128xf32, #tpu.memory_space<vmem>>, vector<1x32xf32>
    %c216 = arith.constant 216 : index
    %c0_6 = arith.constant 0 : index
    %11 = vector.load %arg1[%c216, %c0_6] : memref<264x128xf32, #tpu.memory_space<vmem>>, vector<1x32xf32>
    %12 = vector.extract_strided_slice %7 {offsets = [0, 0], sizes = [32, 8], strides = [1, 1]} : vector<256x8xf32> to vector<32x8xf32>
    %13 = vector.extract_strided_slice %7 {offsets = [32, 0], sizes = [32, 8], strides = [1, 1]} : vector<256x8xf32> to vector<32x8xf32>
    %cst_7 = arith.constant dense<0.000000e+00> : vector<32x32xf32>
    %14 = tpu.matmul %12, %8, %cst_7 {dimension_numbers = #tpu.dot_dimension_numbers<[1], [0], [0], [1], [0, 0, 1, 1], [], []>} : vector<32x8xf32>, vector<8x32xf32>, vector<32x32xf32> -> vector<32x32xf32>
    %cst_8 = arith.constant dense<0.000000e+00> : vector<32x32xf32>
    %15 = tpu.matmul %13, %9, %cst_8 {dimension_numbers = #tpu.dot_dimension_numbers<[1], [0], [0], [1], [0, 0, 1, 1], [], []>} : vector<32x8xf32>, vector<8x32xf32>, vector<32x32xf32> -> vector<32x32xf32>
    %16 = arith.addf %14, %15 : vector<32x32xf32>
    %17 = vector.extract_strided_slice %7 {offsets = [64, 0], sizes = [32, 8], strides = [1, 1]} : vector<256x8xf32> to vector<32x8xf32>
    %18 = vector.extract_strided_slice %7 {offsets = [96, 0], sizes = [32, 8], strides = [1, 1]} : vector<256x8xf32> to vector<32x8xf32>
    %cst_9 = arith.constant dense<0.000000e+00> : vector<32x32xf32>
    %19 = tpu.matmul %17, %8, %cst_9 {dimension_numbers = #tpu.dot_dimension_numbers<[1], [0], [0], [1], [0, 0, 1, 1], [], []>} : vector<32x8xf32>, vector<8x32xf32>, vector<32x32xf32> -> vector<32x32xf32>
    %cst_10 = arith.constant dense<0.000000e+00> : vector<32x32xf32>
    %20 = tpu.matmul %18, %9, %cst_10 {dimension_numbers = #tpu.dot_dimension_numbers<[1], [0], [0], [1], [0, 0, 1, 1], [], []>} : vector<32x8xf32>, vector<8x32xf32>, vector<32x32xf32> -> vector<32x32xf32>
    %21 = arith.addf %19, %20 : vector<32x32xf32>
    %22 = vector.extract_strided_slice %7 {offsets = [128, 0], sizes = [32, 8], strides = [1, 1]} : vector<256x8xf32> to vector<32x8xf32>
    %23 = vector.extract_strided_slice %7 {offsets = [160, 0], sizes = [32, 8], strides = [1, 1]} : vector<256x8xf32> to vector<32x8xf32>
    %cst_11 = arith.constant dense<0.000000e+00> : vector<32x32xf32>
    %24 = tpu.matmul %22, %8, %cst_11 {dimension_numbers = #tpu.dot_dimension_numbers<[1], [0], [0], [1], [0, 0, 1, 1], [], []>} : vector<32x8xf32>, vector<8x32xf32>, vector<32x32xf32> -> vector<32x32xf32>
    %cst_12 = arith.constant dense<0.000000e+00> : vector<32x32xf32>
    %25 = tpu.matmul %23, %9, %cst_12 {dimension_numbers = #tpu.dot_dimension_numbers<[1], [0], [0], [1], [0, 0, 1, 1], [], []>} : vector<32x8xf32>, vector<8x32xf32>, vector<32x32xf32> -> vector<32x32xf32>
    %26 = arith.addf %24, %25 : vector<32x32xf32>
    %27 = vector.extract_strided_slice %7 {offsets = [192, 0], sizes = [32, 8], strides = [1, 1]} : vector<256x8xf32> to vector<32x8xf32>
    %28 = vector.extract_strided_slice %7 {offsets = [224, 0], sizes = [32, 8], strides = [1, 1]} : vector<256x8xf32> to vector<32x8xf32>
    %cst_13 = arith.constant dense<0.000000e+00> : vector<32x32xf32>
    %29 = tpu.matmul %27, %8, %cst_13 {dimension_numbers = #tpu.dot_dimension_numbers<[1], [0], [0], [1], [0, 0, 1, 1], [], []>} : vector<32x8xf32>, vector<8x32xf32>, vector<32x32xf32> -> vector<32x32xf32>
    %cst_14 = arith.constant dense<0.000000e+00> : vector<32x32xf32>
    %30 = tpu.matmul %28, %9, %cst_14 {dimension_numbers = #tpu.dot_dimension_numbers<[1], [0], [0], [1], [0, 0, 1, 1], [], []>} : vector<32x8xf32>, vector<8x32xf32>, vector<32x32xf32> -> vector<32x32xf32>
    %31 = arith.addf %29, %30 : vector<32x32xf32>
    %32 = tpu.concatenate %16, %21, %26, %31 in 0 : vector<32x32xf32>, vector<32x32xf32>, vector<32x32xf32>, vector<32x32xf32> -> vector<128x32xf32>
    %cst_15 = arith.constant dense<0.000000e+00> : vector<32xf32>
    %33 = vector.multi_reduction <add>, %32, %cst_15 [0] : vector<128x32xf32> to vector<32xf32>
    %34 = vector.shape_cast %33 : vector<32xf32> to vector<1x32xf32>
    %cst_16 = arith.constant 1.280000e+02 : f32
    %35 = vector.broadcast %cst_16 : f32 to vector<1x32xf32>
    %36 = arith.divf %34, %35 : vector<1x32xf32>
    %37 = vector.broadcast %36 : vector<1x32xf32> to vector<128x32xf32>
    %38 = arith.subf %32, %37 : vector<128x32xf32>
    %39 = arith.mulf %38, %38 : vector<128x32xf32>
    %cst_17 = arith.constant dense<0.000000e+00> : vector<32xf32>
    %40 = vector.multi_reduction <add>, %39, %cst_17 [0] : vector<128x32xf32> to vector<32xf32>
    %41 = vector.shape_cast %40 : vector<32xf32> to vector<1x32xf32>
    %cst_18 = arith.constant 1.280000e+02 : f32
    %42 = vector.broadcast %cst_18 : f32 to vector<1x32xf32>
    %43 = arith.divf %41, %42 : vector<1x32xf32>
    %cst_19 = arith.constant 9.99999974E-6 : f32
    %44 = vector.broadcast %cst_19 : f32 to vector<1x32xf32>
    %45 = arith.addf %43, %44 : vector<1x32xf32>
    %46 = math.rsqrt %45 : vector<1x32xf32>
    %47 = vector.broadcast %46 : vector<1x32xf32> to vector<128x32xf32>
    %48 = arith.mulf %38, %47 : vector<128x32xf32>
    %49 = vector.broadcast %10 : vector<1x32xf32> to vector<128x32xf32>
    %50 = arith.mulf %49, %48 : vector<128x32xf32>
    %51 = vector.broadcast %11 : vector<1x32xf32> to vector<128x32xf32>
    %52 = arith.addf %50, %51 : vector<128x32xf32>
    %53 = math.tanh %52 : vector<128x32xf32>
    %c48 = arith.constant 48 : index
    %c0_20 = arith.constant 0 : index
    %54 = vector.load %arg1[%c48, %c0_20] : memref<264x128xf32, #tpu.memory_space<vmem>>, vector<32x32xf32>
    %c80 = arith.constant 80 : index
    %c0_21 = arith.constant 0 : index
    %55 = vector.load %arg1[%c80, %c0_21] : memref<264x128xf32, #tpu.memory_space<vmem>>, vector<32x32xf32>
    %c224 = arith.constant 224 : index
    %c0_22 = arith.constant 0 : index
    %56 = vector.load %arg1[%c224, %c0_22] : memref<264x128xf32, #tpu.memory_space<vmem>>, vector<1x32xf32>
    %c232 = arith.constant 232 : index
    %c0_23 = arith.constant 0 : index
    %57 = vector.load %arg1[%c232, %c0_23] : memref<264x128xf32, #tpu.memory_space<vmem>>, vector<1x32xf32>
    %58 = vector.extract_strided_slice %53 {offsets = [0, 0], sizes = [32, 32], strides = [1, 1]} : vector<128x32xf32> to vector<32x32xf32>
    %59 = vector.extract_strided_slice %53 {offsets = [32, 0], sizes = [32, 32], strides = [1, 1]} : vector<128x32xf32> to vector<32x32xf32>
    %cst_24 = arith.constant dense<0.000000e+00> : vector<32x32xf32>
    %60 = tpu.matmul %58, %54, %cst_24 {dimension_numbers = #tpu.dot_dimension_numbers<[1], [0], [0], [1], [0, 0, 1, 1], [], []>} : vector<32x32xf32>, vector<32x32xf32>, vector<32x32xf32> -> vector<32x32xf32>
    %cst_25 = arith.constant dense<0.000000e+00> : vector<32x32xf32>
    %61 = tpu.matmul %59, %55, %cst_25 {dimension_numbers = #tpu.dot_dimension_numbers<[1], [0], [0], [1], [0, 0, 1, 1], [], []>} : vector<32x32xf32>, vector<32x32xf32>, vector<32x32xf32> -> vector<32x32xf32>
    %62 = arith.addf %60, %61 : vector<32x32xf32>
    %63 = vector.extract_strided_slice %53 {offsets = [64, 0], sizes = [32, 32], strides = [1, 1]} : vector<128x32xf32> to vector<32x32xf32>
    %64 = vector.extract_strided_slice %53 {offsets = [96, 0], sizes = [32, 32], strides = [1, 1]} : vector<128x32xf32> to vector<32x32xf32>
    %cst_26 = arith.constant dense<0.000000e+00> : vector<32x32xf32>
    %65 = tpu.matmul %63, %54, %cst_26 {dimension_numbers = #tpu.dot_dimension_numbers<[1], [0], [0], [1], [0, 0, 1, 1], [], []>} : vector<32x32xf32>, vector<32x32xf32>, vector<32x32xf32> -> vector<32x32xf32>
    %cst_27 = arith.constant dense<0.000000e+00> : vector<32x32xf32>
    %66 = tpu.matmul %64, %55, %cst_27 {dimension_numbers = #tpu.dot_dimension_numbers<[1], [0], [0], [1], [0, 0, 1, 1], [], []>} : vector<32x32xf32>, vector<32x32xf32>, vector<32x32xf32> -> vector<32x32xf32>
    %67 = arith.addf %65, %66 : vector<32x32xf32>
    %68 = tpu.concatenate %62, %67 in 0 : vector<32x32xf32>, vector<32x32xf32> -> vector<64x32xf32>
    %cst_28 = arith.constant dense<0.000000e+00> : vector<32xf32>
    %69 = vector.multi_reduction <add>, %68, %cst_28 [0] : vector<64x32xf32> to vector<32xf32>
    %70 = vector.shape_cast %69 : vector<32xf32> to vector<1x32xf32>
    %cst_29 = arith.constant 6.400000e+01 : f32
    %71 = vector.broadcast %cst_29 : f32 to vector<1x32xf32>
    %72 = arith.divf %70, %71 : vector<1x32xf32>
    %73 = vector.broadcast %72 : vector<1x32xf32> to vector<64x32xf32>
    %74 = arith.subf %68, %73 : vector<64x32xf32>
    %75 = arith.mulf %74, %74 : vector<64x32xf32>
    %cst_30 = arith.constant dense<0.000000e+00> : vector<32xf32>
    %76 = vector.multi_reduction <add>, %75, %cst_30 [0] : vector<64x32xf32> to vector<32xf32>
    %77 = vector.shape_cast %76 : vector<32xf32> to vector<1x32xf32>
    %cst_31 = arith.constant 6.400000e+01 : f32
    %78 = vector.broadcast %cst_31 : f32 to vector<1x32xf32>
    %79 = arith.divf %77, %78 : vector<1x32xf32>
    %cst_32 = arith.constant 9.99999974E-6 : f32
    %80 = vector.broadcast %cst_32 : f32 to vector<1x32xf32>
    %81 = arith.addf %79, %80 : vector<1x32xf32>
    %82 = math.rsqrt %81 : vector<1x32xf32>
    %83 = vector.broadcast %82 : vector<1x32xf32> to vector<64x32xf32>
    %84 = arith.mulf %74, %83 : vector<64x32xf32>
    %85 = vector.broadcast %56 : vector<1x32xf32> to vector<64x32xf32>
    %86 = arith.mulf %85, %84 : vector<64x32xf32>
    %87 = vector.broadcast %57 : vector<1x32xf32> to vector<64x32xf32>
    %88 = arith.addf %86, %87 : vector<64x32xf32>
    %89 = math.tanh %88 : vector<64x32xf32>
    %c112 = arith.constant 112 : index
    %c0_33 = arith.constant 0 : index
    %90 = vector.load %arg1[%c112, %c0_33] : memref<264x128xf32, #tpu.memory_space<vmem>>, vector<32x32xf32>
    %c144 = arith.constant 144 : index
    %c0_34 = arith.constant 0 : index
    %91 = vector.load %arg1[%c144, %c0_34] : memref<264x128xf32, #tpu.memory_space<vmem>>, vector<32x32xf32>
    %c240 = arith.constant 240 : index
    %c0_35 = arith.constant 0 : index
    %92 = vector.load %arg1[%c240, %c0_35] : memref<264x128xf32, #tpu.memory_space<vmem>>, vector<1x32xf32>
    %c248 = arith.constant 248 : index
    %c0_36 = arith.constant 0 : index
    %93 = vector.load %arg1[%c248, %c0_36] : memref<264x128xf32, #tpu.memory_space<vmem>>, vector<1x32xf32>
    %94 = vector.extract_strided_slice %89 {offsets = [0, 0], sizes = [32, 32], strides = [1, 1]} : vector<64x32xf32> to vector<32x32xf32>
    %95 = vector.extract_strided_slice %89 {offsets = [32, 0], sizes = [32, 32], strides = [1, 1]} : vector<64x32xf32> to vector<32x32xf32>
    %cst_37 = arith.constant dense<0.000000e+00> : vector<32x32xf32>
    %96 = tpu.matmul %94, %90, %cst_37 {dimension_numbers = #tpu.dot_dimension_numbers<[1], [0], [0], [1], [0, 0, 1, 1], [], []>} : vector<32x32xf32>, vector<32x32xf32>, vector<32x32xf32> -> vector<32x32xf32>
    %cst_38 = arith.constant dense<0.000000e+00> : vector<32x32xf32>
    %97 = tpu.matmul %95, %91, %cst_38 {dimension_numbers = #tpu.dot_dimension_numbers<[1], [0], [0], [1], [0, 0, 1, 1], [], []>} : vector<32x32xf32>, vector<32x32xf32>, vector<32x32xf32> -> vector<32x32xf32>
    %98 = arith.addf %96, %97 : vector<32x32xf32>
    %cst_39 = arith.constant dense<0.000000e+00> : vector<32xf32>
    %99 = vector.multi_reduction <add>, %98, %cst_39 [0] : vector<32x32xf32> to vector<32xf32>
    %100 = vector.shape_cast %99 : vector<32xf32> to vector<1x32xf32>
    %cst_40 = arith.constant 3.200000e+01 : f32
    %101 = vector.broadcast %cst_40 : f32 to vector<1x32xf32>
    %102 = arith.divf %100, %101 : vector<1x32xf32>
    %103 = vector.broadcast %102 : vector<1x32xf32> to vector<32x32xf32>
    %104 = arith.subf %98, %103 : vector<32x32xf32>
    %105 = arith.mulf %104, %104 : vector<32x32xf32>
    %cst_41 = arith.constant dense<0.000000e+00> : vector<32xf32>
    %106 = vector.multi_reduction <add>, %105, %cst_41 [0] : vector<32x32xf32> to vector<32xf32>
    %107 = vector.shape_cast %106 : vector<32xf32> to vector<1x32xf32>
    %cst_42 = arith.constant 3.200000e+01 : f32
    %108 = vector.broadcast %cst_42 : f32 to vector<1x32xf32>
    %109 = arith.divf %107, %108 : vector<1x32xf32>
    %cst_43 = arith.constant 9.99999974E-6 : f32
    %110 = vector.broadcast %cst_43 : f32 to vector<1x32xf32>
    %111 = arith.addf %109, %110 : vector<1x32xf32>
    %112 = math.rsqrt %111 : vector<1x32xf32>
    %113 = vector.broadcast %112 : vector<1x32xf32> to vector<32x32xf32>
    %114 = arith.mulf %104, %113 : vector<32x32xf32>
    %115 = vector.broadcast %92 : vector<1x32xf32> to vector<32x32xf32>
    %116 = arith.mulf %115, %114 : vector<32x32xf32>
    %117 = vector.broadcast %93 : vector<1x32xf32> to vector<32x32xf32>
    %118 = arith.addf %116, %117 : vector<32x32xf32>
    %119 = math.tanh %118 : vector<32x32xf32>
    %c176 = arith.constant 176 : index
    %c0_44 = arith.constant 0 : index
    %120 = vector.load %arg1[%c176, %c0_44] : memref<264x128xf32, #tpu.memory_space<vmem>>, vector<32x128xf32>
    %cst_45 = arith.constant dense<0.000000e+00> : vector<32x128xf32>
    %121 = tpu.matmul %119, %120, %cst_45 {dimension_numbers = #tpu.dot_dimension_numbers<[1], [0], [0], [1], [0, 0, 1, 1], [], []>} : vector<32x32xf32>, vector<32x128xf32>, vector<32x128xf32> -> vector<32x128xf32>
    %c256 = arith.constant 256 : index
    %c0_46 = arith.constant 0 : index
    %122 = vector.load %arg1[%c256, %c0_46] : memref<264x128xf32, #tpu.memory_space<vmem>>, vector<1x128xf32>
    %123 = vector.broadcast %122 : vector<1x128xf32> to vector<32x128xf32>
    %124 = arith.addf %121, %123 : vector<32x128xf32>
    %c0_47 = arith.constant 0 : index
    %c0_48 = arith.constant 0 : index
    %125 = vector.load %arg2[%c0_47, %c0_48] : memref<32x128xf32, #tpu.memory_space<vmem>>, vector<32x128xf32>
    tpu.vector_store %arg2[%c0_47, %c0_48], %124 {strides = array<i32>} : memref<32x128xf32, #tpu.memory_space<vmem>>, vector<32x128xf32>,
    return
  }
}

</mosaic_0001>

<llo_original>
// kernel: _lambda_.1
$region0: #{_lambda_.1}
  #allocation0 [shape = 'u32[]', space=smem, size = 0x4, offset = 0x4, fixed_abs, tag = 'smem constant byte address 0x4 - core index']
  #allocation1 [shape = 'u32[144,128]{1,0:T(1,128)}', space=vmem, size = 0x12000, scoped, tag = 'internal scratch']
  %s0 = inlined_call_operand.vmem [shape: s32[256,1], index: 0, kind: input, shape index: {}]
  %s1 = inlined_call_operand.vmem [shape: f32[264,128], index: 1, kind: input, shape index: {}]
  %s2 = inlined_call_operand.hbm [shape: f32[32,128], index: 2, kind: output, shape index: {}]
  %s3 = sld [smem:[#allocation0]]
  $region18: #{_lambda_.1} parent=0
    _
  %s5 = ssub.s32 1, %s3
  %s6 = scalar_select 0, %s5, %s3
  $region1: #{_lambda_.1} parent=0
    #allocation2 [shape = 'u8[16384]{0}', space=vmem, size = 0x4000, scoped, tag = 'output window, operand 0, single buffered']
    #allocation3 [shape = 's32[1]{0}', space=sflag, size = 0x4, scoped, tag = 'scoped memory for _lambda_.1']
    %7 = vsyncpa [#allocation3], 0
    // Predicated region
    $region2: #{_lambda_.1} parent=1 // pred_check
      _
    $region3: #{_lambda_.1} parent=1 // pred_check_branch
      %9 = sbr.rel (0) target = $region5
    $region4: #{_lambda_.1} parent=1 // pred_region
      _
    $region5: #{_lambda_.1} parent=1 // pred_fallthru
      _
    // Predicated region
    $region6: #{_lambda_.1} parent=1 // pred_check
      _
    $region7: #{_lambda_.1} parent=1 // pred_check_branch
      %11 = sbr.rel (0) target = $region9
    $region8: #{_lambda_.1} parent=1 // pred_region
      _
    $region9: #{_lambda_.1} parent=1 // pred_fallthru
      _
    %v12 = vld [vmem:[%s1] sm:$0xff]
    %v13 = vld [vmem:[%s1 + $0x8] sm:$0xff]
    %v14 = vld [vmem:[%s1 + $0x10] sm:$0xff]
    %v15 = vld [vmem:[%s1 + $0x18] sm:$0xff]
    %v16 = vlaneseq
    %v17 = vand.u32 %v16, 127
    %v18 = vld [vmem:[%s0] sm:$0xff]
    %v19 = vld [vmem:[%s0 + $0x8] sm:$0xff]
    %v20 = vld [vmem:[%s0 + $0x10] sm:$0xff]
    %v21 = vld [vmem:[%s0 + $0x18] sm:$0xff]
    %v22 = vld [vmem:[%s0 + $0x20] sm:$0xff]
    %v23 = vld [vmem:[%s0 + $0x28] sm:$0xff]
    %v24 = vld [vmem:[%s0 + $0x30] sm:$0xff]
    %v25 = vld [vmem:[%s0 + $0x38] sm:$0xff]
    %v26 = vld [vmem:[%s0 + $0x40] sm:$0xff]
    %v27 = vld [vmem:[%s0 + $0x48] sm:$0xff]
    %v28 = vld [vmem:[%s0 + $0x50] sm:$0xff]
    %v29 = vld [vmem:[%s0 + $0x58] sm:$0xff]
    %v30 = vld [vmem:[%s0 + $0x60] sm:$0xff]
    %v31 = vld [vmem:[%s0 + $0x68] sm:$0xff]
    %v32 = vld [vmem:[%s0 + $0x70] sm:$0xff]
    %v33 = vld [vmem:[%s0 + $0x78] sm:$0xff]
    %v34 = vld [vmem:[%s0 + $0x80] sm:$0xff]
    %v35 = vld [vmem:[%s0 + $0x88] sm:$0xff]
    %v36 = vld [vmem:[%s0 + $0x90] sm:$0xff]
    %v37 = vld [vmem:[%s0 + $0x98] sm:$0xff]
    %v38 = vld [vmem:[%s0 + $0xa0] sm:$0xff]
    %v39 = vld [vmem:[%s0 + $0xa8] sm:$0xff]
    %v40 = vld [vmem:[%s0 + $0xb0] sm:$0xff]
    %v41 = vld [vmem:[%s0 + $0xb8] sm:$0xff]
    %v42 = vld [vmem:[%s0 + $0xc0] sm:$0xff]
    %v43 = vld [vmem:[%s0 + $0xc8] sm:$0xff]
    %v44 = vld [vmem:[%s0 + $0xd0] sm:$0xff]
    %v45 = vld [vmem:[%s0 + $0xd8] sm:$0xff]
    %v46 = vld [vmem:[%s0 + $0xe0] sm:$0xff]
    %v47 = vld [vmem:[%s0 + $0xe8] sm:$0xff]
    %v48 = vld [vmem:[%s0 + $0xf0] sm:$0xff]
    %v49 = vld [vmem:[%s0 + $0xf8] sm:$0xff]
    %50 = vset.pattern.permute.xlu0 0
    %51 = vperm.xlu0 %50, %v18
    %v52 = vpop.permute.xlu0 %51
    %53 = vset.pattern.permute.xlu0 0
    %54 = vperm.xlu0 %53, %v19
    %v55 = vpop.permute.xlu0 %54
    %56 = vset.pattern.permute.xlu0 0
    %57 = vperm.xlu0 %56, %v20
    %v58 = vpop.permute.xlu0 %57
    %59 = vset.pattern.permute.xlu0 0
    %60 = vperm.xlu0 %59, %v21
    %v61 = vpop.permute.xlu0 %60
    %62 = vset.pattern.permute.xlu0 0
    %63 = vperm.xlu0 %62, %v22
    %v64 = vpop.permute.xlu0 %63
    %65 = vset.pattern.permute.xlu0 0
    %66 = vperm.xlu0 %65, %v23
    %v67 = vpop.permute.xlu0 %66
    %68 = vset.pattern.permute.xlu0 0
    %69 = vperm.xlu0 %68, %v24
    %v70 = vpop.permute.xlu0 %69
    %71 = vset.pattern.permute.xlu0 0
    %72 = vperm.xlu0 %71, %v25
    %v73 = vpop.permute.xlu0 %72
    %74 = vset.pattern.permute.xlu0 0
    %75 = vperm.xlu0 %74, %v26
    %v76 = vpop.permute.xlu0 %75
    %77 = vset.pattern.permute.xlu0 0
    %78 = vperm.xlu0 %77, %v27
    %v79 = vpop.permute.xlu0 %78
    %80 = vset.pattern.permute.xlu0 0
    %81 = vperm.xlu0 %80, %v28
    %v82 = vpop.permute.xlu0 %81
    %83 = vset.pattern.permute.xlu0 0
    %84 = vperm.xlu0 %83, %v29
    %v85 = vpop.permute.xlu0 %84
    %86 = vset.pattern.permute.xlu0 0
    %87 = vperm.xlu0 %86, %v30
    %v88 = vpop.permute.xlu0 %87
    %89 = vset.pattern.permute.xlu0 0
    %90 = vperm.xlu0 %89, %v31
    %v91 = vpop.permute.xlu0 %90
    %92 = vset.pattern.permute.xlu0 0
    %93 = vperm.xlu0 %92, %v32
    %v94 = vpop.permute.xlu0 %93
    %95 = vset.pattern.permute.xlu0 0
    %96 = vperm.xlu0 %95, %v33
    %v97 = vpop.permute.xlu0 %96
    %98 = vset.pattern.permute.xlu0 0
    %99 = vperm.xlu0 %98, %v34
    %v100 = vpop.permute.xlu0 %99
    %101 = vset.pattern.permute.xlu0 0
    %102 = vperm.xlu0 %101, %v35
    %v103 = vpop.permute.xlu0 %102
    %104 = vset.pattern.permute.xlu0 0
    %105 = vperm.xlu0 %104, %v36
    %v106 = vpop.permute.xlu0 %105
    %107 = vset.pattern.permute.xlu0 0
    %108 = vperm.xlu0 %107, %v37
    %v109 = vpop.permute.xlu0 %108
    %110 = vset.pattern.permute.xlu0 0
    %111 = vperm.xlu0 %110, %v38
    %v112 = vpop.permute.xlu0 %111
    %113 = vset.pattern.permute.xlu0 0
    %114 = vperm.xlu0 %113, %v39
    %v115 = vpop.permute.xlu0 %114
    %116 = vset.pattern.permute.xlu0 0
    %117 = vperm.xlu0 %116, %v40
    %v118 = vpop.permute.xlu0 %117
    %119 = vset.pattern.permute.xlu0 0
    %120 = vperm.xlu0 %119, %v41
    %v121 = vpop.permute.xlu0 %120
    %122 = vset.pattern.permute.xlu0 0
    %123 = vperm.xlu0 %122, %v42
    %v124 = vpop.permute.xlu0 %123
    %125 = vset.pattern.permute.xlu0 0
    %126 = vperm.xlu0 %125, %v43
    %v127 = vpop.permute.xlu0 %126
    %128 = vset.pattern.permute.xlu0 0
    %129 = vperm.xlu0 %128, %v44
    %v130 = vpop.permute.xlu0 %129
    %131 = vset.pattern.permute.xlu0 0
    %132 = vperm.xlu0 %131, %v45
    %v133 = vpop.permute.xlu0 %132
    %134 = vset.pattern.permute.xlu0 0
    %135 = vperm.xlu0 %134, %v46
    %v136 = vpop.permute.xlu0 %135
    %137 = vset.pattern.permute.xlu0 0
    %138 = vperm.xlu0 %137, %v47
    %v139 = vpop.permute.xlu0 %138
    %140 = vset.pattern.permute.xlu0 0
    %141 = vperm.xlu0 %140, %v48
    %v142 = vpop.permute.xlu0 %141
    %143 = vset.pattern.permute.xlu0 0
    %144 = vperm.xlu0 %143, %v49
    %v145 = vpop.permute.xlu0 %144
    %vm146 = vcmp.eq.s32.totalorder %v17, %v52
    %vm147 = vcmp.eq.s32.totalorder %v17, %v55
    %vm148 = vcmp.eq.s32.totalorder %v17, %v58
    %vm149 = vcmp.eq.s32.totalorder %v17, %v61
    %vm150 = vcmp.eq.s32.totalorder %v17, %v64
    %vm151 = vcmp.eq.s32.totalorder %v17, %v67
    %vm152 = vcmp.eq.s32.totalorder %v17, %v70
    %vm153 = vcmp.eq.s32.totalorder %v17, %v73
    %vm154 = vcmp.eq.s32.totalorder %v17, %v76
    %vm155 = vcmp.eq.s32.totalorder %v17, %v79
    %vm156 = vcmp.eq.s32.totalorder %v17, %v82
    %vm157 = vcmp.eq.s32.totalorder %v17, %v85
    %vm158 = vcmp.eq.s32.totalorder %v17, %v88
    %vm159 = vcmp.eq.s32.totalorder %v17, %v91
    %vm160 = vcmp.eq.s32.totalorder %v17, %v94
    %vm161 = vcmp.eq.s32.totalorder %v17, %v97
    %vm162 = vcmp.eq.s32.totalorder %v17, %v100
    %vm163 = vcmp.eq.s32.totalorder %v17, %v103
    %vm164 = vcmp.eq.s32.totalorder %v17, %v106
    %vm165 = vcmp.eq.s32.totalorder %v17, %v109
    %vm166 = vcmp.eq.s32.totalorder %v17, %v112
    %vm167 = vcmp.eq.s32.totalorder %v17, %v115
    %vm168 = vcmp.eq.s32.totalorder %v17, %v118
    %vm169 = vcmp.eq.s32.totalorder %v17, %v121
    %vm170 = vcmp.eq.s32.totalorder %v17, %v124
    %vm171 = vcmp.eq.s32.totalorder %v17, %v127
    %vm172 = vcmp.eq.s32.totalorder %v17, %v130
    %vm173 = vcmp.eq.s32.totalorder %v17, %v133
    %vm174 = vcmp.eq.s32.totalorder %v17, %v136
    %vm175 = vcmp.eq.s32.totalorder %v17, %v139
    %vm176 = vcmp.eq.s32.totalorder %v17, %v142
    %vm177 = vcmp.eq.s32.totalorder %v17, %v145
    %v178 = vsel %vm146, 1, 0
    %v179 = vsel %vm147, 1, 0
    %v180 = vsel %vm148, 1, 0
    %v181 = vsel %vm149, 1, 0
    %v182 = vsel %vm150, 1, 0
    %v183 = vsel %vm151, 1, 0
    %v184 = vsel %vm152, 1, 0
    %v185 = vsel %vm153, 1, 0
    %v186 = vsel %vm154, 1, 0
    %v187 = vsel %vm155, 1, 0
    %v188 = vsel %vm156, 1, 0
    %v189 = vsel %vm157, 1, 0
    %v190 = vsel %vm158, 1, 0
    %v191 = vsel %vm159, 1, 0
    %v192 = vsel %vm160, 1, 0
    %v193 = vsel %vm161, 1, 0
    %v194 = vsel %vm162, 1, 0
    %v195 = vsel %vm163, 1, 0
    %v196 = vsel %vm164, 1, 0
    %v197 = vsel %vm165, 1, 0
    %v198 = vsel %vm166, 1, 0
    %v199 = vsel %vm167, 1, 0
    %v200 = vsel %vm168, 1, 0
    %v201 = vsel %vm169, 1, 0
    %v202 = vsel %vm170, 1, 0
    %v203 = vsel %vm171, 1, 0
    %v204 = vsel %vm172, 1, 0
    %v205 = vsel %vm173, 1, 0
    %v206 = vsel %vm174, 1, 0
    %v207 = vsel %vm175, 1, 0
    %v208 = vsel %vm176, 1, 0
    %v209 = vsel %vm177, 1, 0
    %v210 = vcvt.s32.f32 %v178
    %v211 = vcvt.s32.f32 %v179
    %v212 = vcvt.s32.f32 %v180
    %v213 = vcvt.s32.f32 %v181
    %v214 = vcvt.s32.f32 %v182
    %v215 = vcvt.s32.f32 %v183
    %v216 = vcvt.s32.f32 %v184
    %v217 = vcvt.s32.f32 %v185
    %v218 = vcvt.s32.f32 %v186
    %v219 = vcvt.s32.f32 %v187
    %v220 = vcvt.s32.f32 %v188
    %v221 = vcvt.s32.f32 %v189
    %v222 = vcvt.s32.f32 %v190
    %v223 = vcvt.s32.f32 %v191
    %v224 = vcvt.s32.f32 %v192
    %v225 = vcvt.s32.f32 %v193
    %v226 = vcvt.s32.f32 %v194
    %v227 = vcvt.s32.f32 %v195
    %v228 = vcvt.s32.f32 %v196
    %v229 = vcvt.s32.f32 %v197
    %v230 = vcvt.s32.f32 %v198
    %v231 = vcvt.s32.f32 %v199
    %v232 = vcvt.s32.f32 %v200
    %v233 = vcvt.s32.f32 %v201
    %v234 = vcvt.s32.f32 %v202
    %v235 = vcvt.s32.f32 %v203
    %v236 = vcvt.s32.f32 %v204
    %v237 = vcvt.s32.f32 %v205
    %v238 = vcvt.s32.f32 %v206
    %v239 = vcvt.s32.f32 %v207
    %v240 = vcvt.s32.f32 %v208
    %v241 = vcvt.s32.f32 %v209
    %vm242 = vcmask 261120
    %v244 = vsel %vm242, %v210, 0
    %v247 = vsel %vm242, %v211, 0
    %v250 = vsel %vm242, %v212, 0
    %v253 = vsel %vm242, %v213, 0
    %v256 = vsel %vm242, %v214, 0
    %v259 = vsel %vm242, %v215, 0
    %v262 = vsel %vm242, %v216, 0
    %v265 = vsel %vm242, %v217, 0
    %v268 = vsel %vm242, %v218, 0
    %v271 = vsel %vm242, %v219, 0
    %v274 = vsel %vm242, %v220, 0
    %v277 = vsel %vm242, %v221, 0
    %v280 = vsel %vm242, %v222, 0
    %v283 = vsel %vm242, %v223, 0
    %v286 = vsel %vm242, %v224, 0
    %v289 = vsel %vm242, %v225, 0
    %v292 = vsel %vm242, %v226, 0
    %v295 = vsel %vm242, %v227, 0
    %v298 = vsel %vm242, %v228, 0
    %v301 = vsel %vm242, %v229, 0
    %v304 = vsel %vm242, %v230, 0
    %v307 = vsel %vm242, %v231, 0
    %v310 = vsel %vm242, %v232, 0
    %v313 = vsel %vm242, %v233, 0
    %v316 = vsel %vm242, %v234, 0
    %v319 = vsel %vm242, %v235, 0
    %v322 = vsel %vm242, %v236, 0
    %v325 = vsel %vm242, %v237, 0
    %v328 = vsel %vm242, %v238, 0
    %v331 = vsel %vm242, %v239, 0
    %v334 = vsel %vm242, %v240, 0
    %v337 = vsel %vm242, %v241, 0
    %339 = vmatprep.subr.mxu0 0.0
    %340 = vmatpush1.msra.mxu0 0.0
    %341 = vmatprep.subr.mxu0 0.0
    %342 = vmatpush1.msra.mxu0 0.0
    %343 = vmatprep.subr.mxu0 0.0
    %344 = vmatpush1.msra.mxu0 0.0
    %345 = vmatprep.subr.mxu0 0.0
    %346 = vmatpush1.msra.mxu0 0.0
    %347 = vmatprep.subr.mxu0 0.0
    %348 = vmatpush1.msra.mxu0 0.0
    %349 = vmatprep.subr.mxu0 0.0
    %350 = vmatpush1.msra.mxu0 0.0
    %351 = vmatprep.subr.mxu0 0.0
    %352 = vmatpush1.msra.mxu0 0.0
    %353 = vmatprep.subr.mxu0 0.0
    %354 = vmatpush1.msra.mxu0 0.0
    %355 = vmatprep.subr.mxu0 0.0
    %356 = vmatpush1.msra.mxu0 0.0
    %357 = vmatprep.subr.mxu0 0.0
    %358 = vmatpush1.msra.mxu0 0.0
    %359 = vmatprep.subr.mxu0 0.0
    %360 = vmatpush1.msra.mxu0 0.0
    %361 = vmatprep.subr.mxu0 0.0
    %362 = vmatpush1.msra.mxu0 0.0
    %363 = vmatprep.subr.mxu0 0.0
    %364 = vmatpush1.msra.mxu0 %v15
    %365 = vmatprep.subr.mxu0 0.0
    %366 = vmatpush1.msra.mxu0 %v14
    %367 = vmatprep.subr.mxu0 0.0
    %368 = vmatpush1.msra.mxu0 %v13
    %369 = vmatprep.subr.mxu0 0.0
    %370 = vmatpush1.msra.mxu0 %v12
    %371 = vmatprep.subr.mxu0 0.0
    %372 = vmatpush2.msra.mxu0 0.0
    %373 = vmatprep.subr.mxu0 0.0
    %374 = vmatpush2.msra.mxu0 0.0
    %375 = vmatprep.subr.mxu0 0.0
    %376 = vmatpush2.msra.mxu0 0.0
    %377 = vmatprep.subr.mxu0 0.0
    %378 = vmatpush2.msra.mxu0 0.0
    %379 = vmatprep.subr.mxu0 0.0
    %380 = vmatpush2.msra.mxu0 0.0
    %381 = vmatprep.subr.mxu0 0.0
    %382 = vmatpush2.msra.mxu0 0.0
    %383 = vmatprep.subr.mxu0 0.0
    %384 = vmatpush2.msra.mxu0 0.0
    %385 = vmatprep.subr.mxu0 0.0
    %386 = vmatpush2.msra.mxu0 0.0
    %387 = vmatprep.subr.mxu0 0.0
    %388 = vmatpush2.msra.mxu0 0.0
    %389 = vmatprep.subr.mxu0 0.0
    %390 = vmatpush2.msra.mxu0 0.0
    %391 = vmatprep.subr.mxu0 0.0
    %392 = vmatpush2.msra.mxu0 0.0
    %393 = vmatprep.subr.mxu0 0.0
    %394 = vmatpush2.msra.mxu0 0.0
    %395 = vmatprep.subr.mxu0 0.0
    %396 = vmatpush2.msra.mxu0 0.0
    %397 = vmatprep.subr.mxu0 0.0
    %398 = vmatpush2.msra.mxu0 0.0
    %399 = vmatprep.subr.mxu0 0.0
    %400 = vmatpush2.msra.mxu0 0.0
    %401 = vmatprep.subr.mxu0 0.0
    %402 = vmatpush2.msra.mxu0 0.0
    %403 = vmatprep.mubr.f32.mxu0 0.0
    %404 = vmatmul.mubr.f32.gmra.mxu0 %v244
    %v405 = vpop.f32.mrf.mxu0
    %v406 = vadd.f32 0.0, %v405
    %v407 = vpop.f32.mrf.mxu0
    %408 = vmatprep.mubr.f32.mxu0 0.0
    %409 = vmatmul.mubr.f32.gmra.mxu0 %v247
    %v410 = vpop.f32.mrf.mxu0
    %v411 = vadd.f32 0.0, %v410
    %v412 = vpop.f32.mrf.mxu0
    %413 = vmatprep.mubr.f32.mxu0 0.0
    %414 = vmatmul.mubr.f32.gmra.mxu0 %v250
    %v415 = vpop.f32.mrf.mxu0
    %v416 = vadd.f32 0.0, %v415
    %v417 = vpop.f32.mrf.mxu0
    %418 = vmatprep.mubr.f32.mxu0 0.0
    %419 = vmatmul.mubr.f32.gmra.mxu0 %v253
    %v420 = vpop.f32.mrf.mxu0
    %v421 = vadd.f32 0.0, %v420
    %v422 = vpop.f32.mrf.mxu0
    %423 = vmatprep.mubr.f32.mxu0 0.0
    %424 = vmatmul.mubr.f32.gmra.mxu0 %v256
    %v425 = vpop.f32.mrf.mxu0
    %v426 = vadd.f32 0.0, %v425
    %v427 = vpop.f32.mrf.mxu0
    %428 = vmatprep.mubr.f32.mxu0 0.0
    %429 = vmatmul.mubr.f32.gmra.mxu0 %v259
    %v430 = vpop.f32.mrf.mxu0
    %v431 = vadd.f32 0.0, %v430
    %v432 = vpop.f32.mrf.mxu0
    %433 = vmatprep.mubr.f32.mxu0 0.0
    %434 = vmatmul.mubr.f32.gmra.mxu0 %v262
    %v435 = vpop.f32.mrf.mxu0
    %v436 = vadd.f32 0.0, %v435
    %v437 = vpop.f32.mrf.mxu0
    %438 = vmatprep.mubr.f32.mxu0 0.0
    %439 = vmatmul.mubr.f32.gmra.mxu0 %v265
    %v440 = vpop.f32.mrf.mxu0
    %v441 = vadd.f32 0.0, %v440
    %v442 = vpop.f32.mrf.mxu0
    %443 = vmatprep.mubr.f32.mxu0 0.0
    %444 = vmatmul.mubr.f32.gmra.mxu0 %v268
    %v445 = vpop.f32.mrf.mxu0
    %v446 = vadd.f32 0.0, %v445
    %v447 = vpop.f32.mrf.mxu0
    %448 = vmatprep.mubr.f32.mxu0 0.0
    %449 = vmatmul.mubr.f32.gmra.mxu0 %v271
    %v450 = vpop.f32.mrf.mxu0
    %v451 = vadd.f32 0.0, %v450
    %v452 = vpop.f32.mrf.mxu0
    %453 = vmatprep.mubr.f32.mxu0 0.0
    %454 = vmatmul.mubr.f32.gmra.mxu0 %v274
    %v455 = vpop.f32.mrf.mxu0
    %v456 = vadd.f32 0.0, %v455
    %v457 = vpop.f32.mrf.mxu0
    %458 = vmatprep.mubr.f32.mxu0 0.0
    %459 = vmatmul.mubr.f32.gmra.mxu0 %v277
    %v460 = vpop.f32.mrf.mxu0
    %v461 = vadd.f32 0.0, %v460
    %v462 = vpop.f32.mrf.mxu0
    %463 = vmatprep.mubr.f32.mxu0 0.0
    %464 = vmatmul.mubr.f32.gmra.mxu0 %v280
    %v465 = vpop.f32.mrf.mxu0
    %v466 = vadd.f32 0.0, %v465
    %v467 = vpop.f32.mrf.mxu0
    %468 = vmatprep.mubr.f32.mxu0 0.0
    %469 = vmatmul.mubr.f32.gmra.mxu0 %v283
    %v470 = vpop.f32.mrf.mxu0
    %v471 = vadd.f32 0.0, %v470
    %v472 = vpop.f32.mrf.mxu0
    %473 = vmatprep.mubr.f32.mxu0 0.0
    %474 = vmatmul.mubr.f32.gmra.mxu0 %v286
    %v475 = vpop.f32.mrf.mxu0
    %v476 = vadd.f32 0.0, %v475
    %v477 = vpop.f32.mrf.mxu0
    %478 = vmatprep.mubr.f32.mxu0 0.0
    %479 = vmatmul.mubr.f32.gmra.mxu0 %v289
    %v480 = vpop.f32.mrf.mxu0
    %v481 = vadd.f32 0.0, %v480
    %v482 = vpop.f32.mrf.mxu0
    %483 = vmatprep.mubr.f32.mxu0 0.0
    %484 = vmatmul.mubr.f32.gmra.mxu0 %v292
    %v485 = vpop.f32.mrf.mxu0
    %v486 = vadd.f32 0.0, %v485
    %v487 = vpop.f32.mrf.mxu0
    %488 = vmatprep.mubr.f32.mxu0 0.0
    %489 = vmatmul.mubr.f32.gmra.mxu0 %v295
    %v490 = vpop.f32.mrf.mxu0
    %v491 = vadd.f32 0.0, %v490
    %v492 = vpop.f32.mrf.mxu0
    %493 = vmatprep.mubr.f32.mxu0 0.0
    %494 = vmatmul.mubr.f32.gmra.mxu0 %v298
    %v495 = vpop.f32.mrf.mxu0
    %v496 = vadd.f32 0.0, %v495
    %v497 = vpop.f32.mrf.mxu0
    %498 = vmatprep.mubr.f32.mxu0 0.0
    %499 = vmatmul.mubr.f32.gmra.mxu0 %v301
    %v500 = vpop.f32.mrf.mxu0
    %v501 = vadd.f32 0.0, %v500
    %v502 = vpop.f32.mrf.mxu0
    %503 = vmatprep.mubr.f32.mxu0 0.0
    %504 = vmatmul.mubr.f32.gmra.mxu0 %v304
    %v505 = vpop.f32.mrf.mxu0
    %v506 = vadd.f32 0.0, %v505
    %v507 = vpop.f32.mrf.mxu0
    %508 = vmatprep.mubr.f32.mxu0 0.0
    %509 = vmatmul.mubr.f32.gmra.mxu0 %v307
    %v510 = vpop.f32.mrf.mxu0
    %v511 = vadd.f32 0.0, %v510
    %v512 = vpop.f32.mrf.mxu0
    %513 = vmatprep.mubr.f32.mxu0 0.0
    %514 = vmatmul.mubr.f32.gmra.mxu0 %v310
    %v515 = vpop.f32.mrf.mxu0
    %v516 = vadd.f32 0.0, %v515
    %v517 = vpop.f32.mrf.mxu0
    %518 = vmatprep.mubr.f32.mxu0 0.0
    %519 = vmatmul.mubr.f32.gmra.mxu0 %v313
    %v520 = vpop.f32.mrf.mxu0
    %v521 = vadd.f32 0.0, %v520
    %v522 = vpop.f32.mrf.mxu0
    %523 = vmatprep.mubr.f32.mxu0 0.0
    %524 = vmatmul.mubr.f32.gmra.mxu0 %v316
    %v525 = vpop.f32.mrf.mxu0
    %v526 = vadd.f32 0.0, %v525
    %v527 = vpop.f32.mrf.mxu0
    %528 = vmatprep.mubr.f32.mxu0 0.0
    %529 = vmatmul.mubr.f32.gmra.mxu0 %v319
    %v530 = vpop.f32.mrf.mxu0
    %v531 = vadd.f32 0.0, %v530
    %v532 = vpop.f32.mrf.mxu0
    %533 = vmatprep.mubr.f32.mxu0 0.0
    %534 = vmatmul.mubr.f32.gmra.mxu0 %v322
    %v535 = vpop.f32.mrf.mxu0
    %v536 = vadd.f32 0.0, %v535
    %v537 = vpop.f32.mrf.mxu0
    %538 = vmatprep.mubr.f32.mxu0 0.0
    %539 = vmatmul.mubr.f32.gmra.mxu0 %v325
    %v540 = vpop.f32.mrf.mxu0
    %v541 = vadd.f32 0.0, %v540
    %v542 = vpop.f32.mrf.mxu0
    %543 = vmatprep.mubr.f32.mxu0 0.0
    %544 = vmatmul.mubr.f32.gmra.mxu0 %v328
    %v545 = vpop.f32.mrf.mxu0
    %v546 = vadd.f32 0.0, %v545
    %v547 = vpop.f32.mrf.mxu0
    %548 = vmatprep.mubr.f32.mxu0 0.0
    %549 = vmatmul.mubr.f32.gmra.mxu0 %v331
    %v550 = vpop.f32.mrf.mxu0
    %v551 = vadd.f32 0.0, %v550
    %v552 = vpop.f32.mrf.mxu0
    %553 = vmatprep.mubr.f32.mxu0 0.0
    %554 = vmatmul.mubr.f32.gmra.mxu0 %v334
    %v555 = vpop.f32.mrf.mxu0
    %v556 = vadd.f32 0.0, %v555
    %v557 = vpop.f32.mrf.mxu0
    %558 = vmatprep.mubr.f32.mxu0 0.0
    %559 = vmatmul.mubr.f32.gmra.mxu0 %v337
    %v560 = vpop.f32.mrf.mxu0
    %v561 = vadd.f32 0.0, %v560
    %v562 = vpop.f32.mrf.mxu0
    %563 = vdwg.mxu0
    %v564 = vld [vmem:[%s1 + $0x20] sm:$0xff]
    %v565 = vld [vmem:[%s1 + $0x28] sm:$0xff]
    %v566 = vld [vmem:[%s1 + $0xd0] sm:$0x1]
    %v567 = vld [vmem:[%s1 + $0xd8] sm:$0x1]
    %vm568 = vcmask 64512
    %v570 = vsel %vm568, %v426, 0
    %v573 = vsel %vm568, %v431, 0
    %v576 = vsel %vm568, %v436, 0
    %v579 = vsel %vm568, %v441, 0
    %581 = vmatprep.subr.mxu0 0.0
    %582 = vmatpush1.msra.mxu0 0.0
    %583 = vmatprep.subr.mxu0 0.0
    %584 = vmatpush1.msra.mxu0 0.0
    %585 = vmatprep.subr.mxu0 0.0
    %586 = vmatpush1.msra.mxu0 0.0
    %587 = vmatprep.subr.mxu0 0.0
    %588 = vmatpush1.msra.mxu0 0.0
    %589 = vmatprep.subr.mxu0 0.0
    %590 = vmatpush1.msra.mxu0 0.0
    %591 = vmatprep.subr.mxu0 0.0
    %592 = vmatpush1.msra.mxu0 0.0
    %593 = vmatprep.subr.mxu0 0.0
    %594 = vmatpush1.msra.mxu0 0.0
    %595 = vmatprep.subr.mxu0 0.0
    %596 = vmatpush1.msra.mxu0 0.0
    %597 = vmatprep.subr.mxu0 0.0
    %598 = vmatpush1.msra.mxu0 0.0
    %599 = vmatprep.subr.mxu0 0.0
    %600 = vmatpush1.msra.mxu0 0.0
    %601 = vmatprep.subr.mxu0 0.0
    %602 = vmatpush1.msra.mxu0 0.0
    %603 = vmatprep.subr.mxu0 0.0
    %604 = vmatpush1.msra.mxu0 0.0
    %605 = vmatprep.subr.mxu0 0.0
    %606 = vmatpush1.msra.mxu0 0.0
    %607 = vmatprep.subr.mxu0 0.0
    %608 = vmatpush1.msra.mxu0 0.0
    %609 = vmatprep.subr.mxu0 0.0
    %610 = vmatpush1.msra.mxu0 0.0
    %611 = vmatprep.subr.mxu0 0.0
    %612 = vmatpush1.msra.mxu0 %v565
    %613 = vmatprep.subr.mxu0 0.0
    %614 = vmatpush2.msra.mxu0 0.0
    %615 = vmatprep.subr.mxu0 0.0
    %616 = vmatpush2.msra.mxu0 0.0
    %617 = vmatprep.subr.mxu0 0.0
    %618 = vmatpush2.msra.mxu0 0.0
    %619 = vmatprep.subr.mxu0 0.0
    %620 = vmatpush2.msra.mxu0 0.0
    %621 = vmatprep.subr.mxu0 0.0
    %622 = vmatpush2.msra.mxu0 0.0
    %623 = vmatprep.subr.mxu0 0.0
    %624 = vmatpush2.msra.mxu0 0.0
    %625 = vmatprep.subr.mxu0 0.0
    %626 = vmatpush2.msra.mxu0 0.0
    %627 = vmatprep.subr.mxu0 0.0
    %628 = vmatpush2.msra.mxu0 0.0
    %629 = vmatprep.subr.mxu0 0.0
    %630 = vmatpush2.msra.mxu0 0.0
    %631 = vmatprep.subr.mxu0 0.0
    %632 = vmatpush2.msra.mxu0 0.0
    %633 = vmatprep.subr.mxu0 0.0
    %634 = vmatpush2.msra.mxu0 0.0
    %635 = vmatprep.subr.mxu0 0.0
    %636 = vmatpush2.msra.mxu0 0.0
    %637 = vmatprep.subr.mxu0 0.0
    %638 = vmatpush2.msra.mxu0 0.0
    %639 = vmatprep.subr.mxu0 0.0
    %640 = vmatpush2.msra.mxu0 0.0
    %641 = vmatprep.subr.mxu0 0.0
    %642 = vmatpush2.msra.mxu0 0.0
    %643 = vmatprep.subr.mxu0 0.0
    %644 = vmatpush2.msra.mxu0 0.0
    %645 = vmatprep.mubr.f32.mxu0 0.0
    %646 = vmatmul.mubr.f32.gmra.mxu0 %v570
    %v647 = vpop.f32.mrf.mxu0
    %v648 = vadd.f32 0.0, %v647
    %v649 = vpop.f32.mrf.mxu0
    %650 = vmatprep.mubr.f32.mxu0 0.0
    %651 = vmatmul.mubr.f32.gmra.mxu0 %v573
    %v652 = vpop.f32.mrf.mxu0
    %v653 = vadd.f32 0.0, %v652
    %v654 = vpop.f32.mrf.mxu0
    %655 = vmatprep.mubr.f32.mxu0 0.0
    %656 = vmatmul.mubr.f32.gmra.mxu0 %v576
    %v657 = vpop.f32.mrf.mxu0
    %v658 = vadd.f32 0.0, %v657
    %v659 = vpop.f32.mrf.mxu0
    %660 = vmatprep.mubr.f32.mxu0 0.0
    %661 = vmatmul.mubr.f32.gmra.mxu0 %v579
    %v662 = vpop.f32.mrf.mxu0
    %v663 = vadd.f32 0.0, %v662
    %v664 = vpop.f32.mrf.mxu0
    %665 = vdwg.mxu0
    %v667 = vsel %vm568, %v406, 0
    %v670 = vsel %vm568, %v411, 0
    %v673 = vsel %vm568, %v416, 0
    %v676 = vsel %vm568, %v421, 0
    %678 = vmatprep.subr.mxu0 0.0
    %679 = vmatpush1.msra.mxu0 0.0
    %680 = vmatprep.subr.mxu0 0.0
    %681 = vmatpush1.msra.mxu0 0.0
    %682 = vmatprep.subr.mxu0 0.0
    %683 = vmatpush1.msra.mxu0 0.0
    %684 = vmatprep.subr.mxu0 0.0
    %685 = vmatpush1.msra.mxu0 0.0
    %686 = vmatprep.subr.mxu0 0.0
    %687 = vmatpush1.msra.mxu0 0.0
    %688 = vmatprep.subr.mxu0 0.0
    %689 = vmatpush1.msra.mxu0 0.0
    %690 = vmatprep.subr.mxu0 0.0
    %691 = vmatpush1.msra.mxu0 0.0
    %692 = vmatprep.subr.mxu0 0.0
    %693 = vmatpush1.msra.mxu0 0.0
    %694 = vmatprep.subr.mxu0 0.0
    %695 = vmatpush1.msra.mxu0 0.0
    %696 = vmatprep.subr.mxu0 0.0
    %697 = vmatpush1.msra.mxu0 0.0
    %698 = vmatprep.subr.mxu0 0.0
    %699 = vmatpush1.msra.mxu0 0.0
    %700 = vmatprep.subr.mxu0 0.0
    %701 = vmatpush1.msra.mxu0 0.0
    %702 = vmatprep.subr.mxu0 0.0
    %703 = vmatpush1.msra.mxu0 0.0
    %704 = vmatprep.subr.mxu0 0.0
    %705 = vmatpush1.msra.mxu0 0.0
    %706 = vmatprep.subr.mxu0 0.0
    %707 = vmatpush1.msra.mxu0 0.0
    %708 = vmatprep.subr.mxu0 0.0
    %709 = vmatpush1.msra.mxu0 %v564
    %710 = vmatprep.subr.mxu0 0.0
    %711 = vmatpush2.msra.mxu0 0.0
    %712 = vmatprep.subr.mxu0 0.0
    %713 = vmatpush2.msra.mxu0 0.0
    %714 = vmatprep.subr.mxu0 0.0
    %715 = vmatpush2.msra.mxu0 0.0
    %716 = vmatprep.subr.mxu0 0.0
    %717 = vmatpush2.msra.mxu0 0.0
    %718 = vmatprep.subr.mxu0 0.0
    %719 = vmatpush2.msra.mxu0 0.0
    %720 = vmatprep.subr.mxu0 0.0
    %721 = vmatpush2.msra.mxu0 0.0
    %722 = vmatprep.subr.mxu0 0.0
    %723 = vmatpush2.msra.mxu0 0.0
    %724 = vmatprep.subr.mxu0 0.0
    %725 = vmatpush2.msra.mxu0 0.0
    %726 = vmatprep.subr.mxu0 0.0
    %727 = vmatpush2.msra.mxu0 0.0
    %728 = vmatprep.subr.mxu0 0.0
    %729 = vmatpush2.msra.mxu0 0.0
    %730 = vmatprep.subr.mxu0 0.0
    %731 = vmatpush2.msra.mxu0 0.0
    %732 = vmatprep.subr.mxu0 0.0
    %733 = vmatpush2.msra.mxu0 0.0
    %734 = vmatprep.subr.mxu0 0.0
    %735 = vmatpush2.msra.mxu0 0.0
    %736 = vmatprep.subr.mxu0 0.0
    %737 = vmatpush2.msra.mxu0 0.0
    %738 = vmatprep.subr.mxu0 0.0
    %739 = vmatpush2.msra.mxu0 0.0
    %740 = vmatprep.subr.mxu0 0.0
    %741 = vmatpush2.msra.mxu0 0.0
    %742 = vmatprep.mubr.f32.mxu0 0.0
    %743 = vmatmul.mubr.f32.gmra.mxu0 %v667
    %v744 = vpop.f32.mrf.mxu0
    %v745 = vadd.f32 %v648, %v744
    %v746 = vpop.f32.mrf.mxu0
    %747 = vmatprep.mubr.f32.mxu0 0.0
    %748 = vmatmul.mubr.f32.gmra.mxu0 %v670
    %v749 = vpop.f32.mrf.mxu0
    %v750 = vadd.f32 %v653, %v749
    %v751 = vpop.f32.mrf.mxu0
    %752 = vmatprep.mubr.f32.mxu0 0.0
    %753 = vmatmul.mubr.f32.gmra.mxu0 %v673
    %v754 = vpop.f32.mrf.mxu0
    %v755 = vadd.f32 %v658, %v754
    %v756 = vpop.f32.mrf.mxu0
    %757 = vmatprep.mubr.f32.mxu0 0.0
    %758 = vmatmul.mubr.f32.gmra.mxu0 %v676
    %v759 = vpop.f32.mrf.mxu0
    %v760 = vadd.f32 %v663, %v759
    %v761 = vpop.f32.mrf.mxu0
    %762 = vdwg.mxu0
    %v764 = vsel %vm568, %v466, 0
    %v767 = vsel %vm568, %v471, 0
    %v770 = vsel %vm568, %v476, 0
    %v773 = vsel %vm568, %v481, 0
    %775 = vmatprep.subr.mxu0 0.0
    %776 = vmatpush1.msra.mxu0 0.0
    %777 = vmatprep.subr.mxu0 0.0
    %778 = vmatpush1.msra.mxu0 0.0
    %779 = vmatprep.subr.mxu0 0.0
    %780 = vmatpush1.msra.mxu0 0.0
    %781 = vmatprep.subr.mxu0 0.0
    %782 = vmatpush1.msra.mxu0 0.0
    %783 = vmatprep.subr.mxu0 0.0
    %784 = vmatpush1.msra.mxu0 0.0
    %785 = vmatprep.subr.mxu0 0.0
    %786 = vmatpush1.msra.mxu0 0.0
    %787 = vmatprep.subr.mxu0 0.0
    %788 = vmatpush1.msra.mxu0 0.0
    %789 = vmatprep.subr.mxu0 0.0
    %790 = vmatpush1.msra.mxu0 0.0
    %791 = vmatprep.subr.mxu0 0.0
    %792 = vmatpush1.msra.mxu0 0.0
    %793 = vmatprep.subr.mxu0 0.0
    %794 = vmatpush1.msra.mxu0 0.0
    %795 = vmatprep.subr.mxu0 0.0
    %796 = vmatpush1.msra.mxu0 0.0
    %797 = vmatprep.subr.mxu0 0.0
    %798 = vmatpush1.msra.mxu0 0.0
    %799 = vmatprep.subr.mxu0 0.0
    %800 = vmatpush1.msra.mxu0 0.0
    %801 = vmatprep.subr.mxu0 0.0
    %802 = vmatpush1.msra.mxu0 0.0
    %803 = vmatprep.subr.mxu0 0.0
    %804 = vmatpush1.msra.mxu0 0.0
    %805 = vmatprep.subr.mxu0 0.0
    %806 = vmatpush1.msra.mxu0 %v565
    %807 = vmatprep.subr.mxu0 0.0
    %808 = vmatpush2.msra.mxu0 0.0
    %809 = vmatprep.subr.mxu0 0.0
    %810 = vmatpush2.msra.mxu0 0.0
    %811 = vmatprep.subr.mxu0 0.0
    %812 = vmatpush2.msra.mxu0 0.0
    %813 = vmatprep.subr.mxu0 0.0
    %814 = vmatpush2.msra.mxu0 0.0
    %815 = vmatprep.subr.mxu0 0.0
    %816 = vmatpush2.msra.mxu0 0.0
    %817 = vmatprep.subr.mxu0 0.0
    %818 = vmatpush2.msra.mxu0 0.0
    %819 = vmatprep.subr.mxu0 0.0
    %820 = vmatpush2.msra.mxu0 0.0
    %821 = vmatprep.subr.mxu0 0.0
    %822 = vmatpush2.msra.mxu0 0.0
    %823 = vmatprep.subr.mxu0 0.0
    %824 = vmatpush2.msra.mxu0 0.0
    %825 = vmatprep.subr.mxu0 0.0
    %826 = vmatpush2.msra.mxu0 0.0
    %827 = vmatprep.subr.mxu0 0.0
    %828 = vmatpush2.msra.mxu0 0.0
    %829 = vmatprep.subr.mxu0 0.0
    %830 = vmatpush2.msra.mxu0 0.0
    %831 = vmatprep.subr.mxu0 0.0
    %832 = vmatpush2.msra.mxu0 0.0
    %833 = vmatprep.subr.mxu0 0.0
    %834 = vmatpush2.msra.mxu0 0.0
    %835 = vmatprep.subr.mxu0 0.0
    %836 = vmatpush2.msra.mxu0 0.0
    %837 = vmatprep.subr.mxu0 0.0
    %838 = vmatpush2.msra.mxu0 0.0
    %839 = vmatprep.mubr.f32.mxu0 0.0
    %840 = vmatmul.mubr.f32.gmra.mxu0 %v764
    %v841 = vpop.f32.mrf.mxu0
    %v842 = vadd.f32 0.0, %v841
    %v843 = vpop.f32.mrf.mxu0
    %844 = vmatprep.mubr.f32.mxu0 0.0
    %845 = vmatmul.mubr.f32.gmra.mxu0 %v767
    %v846 = vpop.f32.mrf.mxu0
    %v847 = vadd.f32 0.0, %v846
    %v848 = vpop.f32.mrf.mxu0
    %849 = vmatprep.mubr.f32.mxu0 0.0
    %850 = vmatmul.mubr.f32.gmra.mxu0 %v770
    %v851 = vpop.f32.mrf.mxu0
    %v852 = vadd.f32 0.0, %v851
    %v853 = vpop.f32.mrf.mxu0
    %854 = vmatprep.mubr.f32.mxu0 0.0
    %855 = vmatmul.mubr.f32.gmra.mxu0 %v773
    %v856 = vpop.f32.mrf.mxu0
    %v857 = vadd.f32 0.0, %v856
    %v858 = vpop.f32.mrf.mxu0
    %859 = vdwg.mxu0
    %v861 = vsel %vm568, %v446, 0
    %v864 = vsel %vm568, %v451, 0
    %v867 = vsel %vm568, %v456, 0
    %v870 = vsel %vm568, %v461, 0
    %872 = vmatprep.subr.mxu0 0.0
    %873 = vmatpush1.msra.mxu0 0.0
    %874 = vmatprep.subr.mxu0 0.0
    %875 = vmatpush1.msra.mxu0 0.0
    %876 = vmatprep.subr.mxu0 0.0
    %877 = vmatpush1.msra.mxu0 0.0
    %878 = vmatprep.subr.mxu0 0.0
    %879 = vmatpush1.msra.mxu0 0.0
    %880 = vmatprep.subr.mxu0 0.0
    %881 = vmatpush1.msra.mxu0 0.0
    %882 = vmatprep.subr.mxu0 0.0
    %883 = vmatpush1.msra.mxu0 0.0
    %884 = vmatprep.subr.mxu0 0.0
    %885 = vmatpush1.msra.mxu0 0.0
    %886 = vmatprep.subr.mxu0 0.0
    %887 = vmatpush1.msra.mxu0 0.0
    %888 = vmatprep.subr.mxu0 0.0
    %889 = vmatpush1.msra.mxu0 0.0
    %890 = vmatprep.subr.mxu0 0.0
    %891 = vmatpush1.msra.mxu0 0.0
    %892 = vmatprep.subr.mxu0 0.0
    %893 = vmatpush1.msra.mxu0 0.0
    %894 = vmatprep.subr.mxu0 0.0
    %895 = vmatpush1.msra.mxu0 0.0
    %896 = vmatprep.subr.mxu0 0.0
    %897 = vmatpush1.msra.mxu0 0.0
    %898 = vmatprep.subr.mxu0 0.0
    %899 = vmatpush1.msra.mxu0 0.0
    %900 = vmatprep.subr.mxu0 0.0
    %901 = vmatpush1.msra.mxu0 0.0
    %902 = vmatprep.subr.mxu0 0.0
    %903 = vmatpush1.msra.mxu0 %v564
    %904 = vmatprep.subr.mxu0 0.0
    %905 = vmatpush2.msra.mxu0 0.0
    %906 = vmatprep.subr.mxu0 0.0
    %907 = vmatpush2.msra.mxu0 0.0
    %908 = vmatprep.subr.mxu0 0.0
    %909 = vmatpush2.msra.mxu0 0.0
    %910 = vmatprep.subr.mxu0 0.0
    %911 = vmatpush2.msra.mxu0 0.0
    %912 = vmatprep.subr.mxu0 0.0
    %913 = vmatpush2.msra.mxu0 0.0
    %914 = vmatprep.subr.mxu0 0.0
    %915 = vmatpush2.msra.mxu0 0.0
    %916 = vmatprep.subr.mxu0 0.0
    %917 = vmatpush2.msra.mxu0 0.0
    %918 = vmatprep.subr.mxu0 0.0
    %919 = vmatpush2.msra.mxu0 0.0
    %920 = vmatprep.subr.mxu0 0.0
    %921 = vmatpush2.msra.mxu0 0.0
    %922 = vmatprep.subr.mxu0 0.0
    %923 = vmatpush2.msra.mxu0 0.0
    %924 = vmatprep.subr.mxu0 0.0
    %925 = vmatpush2.msra.mxu0 0.0
    %926 = vmatprep.subr.mxu0 0.0
    %927 = vmatpush2.msra.mxu0 0.0
    %928 = vmatprep.subr.mxu0 0.0
    %929 = vmatpush2.msra.mxu0 0.0
    %930 = vmatprep.subr.mxu0 0.0
    %931 = vmatpush2.msra.mxu0 0.0
    %932 = vmatprep.subr.mxu0 0.0
    %933 = vmatpush2.msra.mxu0 0.0
    %934 = vmatprep.subr.mxu0 0.0
    %935 = vmatpush2.msra.mxu0 0.0
    %936 = vmatprep.mubr.f32.mxu0 0.0
    %937 = vmatmul.mubr.f32.gmra.mxu0 %v861
    %v938 = vpop.f32.mrf.mxu0
    %v939 = vadd.f32 %v842, %v938
    %v940 = vpop.f32.mrf.mxu0
    %941 = vmatprep.mubr.f32.mxu0 0.0
    %942 = vmatmul.mubr.f32.gmra.mxu0 %v864
    %v943 = vpop.f32.mrf.mxu0
    %v944 = vadd.f32 %v847, %v943
    %v945 = vpop.f32.mrf.mxu0
    %946 = vmatprep.mubr.f32.mxu0 0.0
    %947 = vmatmul.mubr.f32.gmra.mxu0 %v867
    %v948 = vpop.f32.mrf.mxu0
    %v949 = vadd.f32 %v852, %v948
    %v950 = vpop.f32.mrf.mxu0
    %951 = vmatprep.mubr.f32.mxu0 0.0
    %952 = vmatmul.mubr.f32.gmra.mxu0 %v870
    %v953 = vpop.f32.mrf.mxu0
    %v954 = vadd.f32 %v857, %v953
    %v955 = vpop.f32.mrf.mxu0
    %956 = vdwg.mxu0
    %v958 = vsel %vm568, %v506, 0
    %v961 = vsel %vm568, %v511, 0
    %v964 = vsel %vm568, %v516, 0
    %v967 = vsel %vm568, %v521, 0
    %969 = vmatprep.subr.mxu0 0.0
    %970 = vmatpush1.msra.mxu0 0.0
    %971 = vmatprep.subr.mxu0 0.0
    %972 = vmatpush1.msra.mxu0 0.0
    %973 = vmatprep.subr.mxu0 0.0
    %974 = vmatpush1.msra.mxu0 0.0
    %975 = vmatprep.subr.mxu0 0.0
    %976 = vmatpush1.msra.mxu0 0.0
    %977 = vmatprep.subr.mxu0 0.0
    %978 = vmatpush1.msra.mxu0 0.0
    %979 = vmatprep.subr.mxu0 0.0
    %980 = vmatpush1.msra.mxu0 0.0
    %981 = vmatprep.subr.mxu0 0.0
    %982 = vmatpush1.msra.mxu0 0.0
    %983 = vmatprep.subr.mxu0 0.0
    %984 = vmatpush1.msra.mxu0 0.0
    %985 = vmatprep.subr.mxu0 0.0
    %986 = vmatpush1.msra.mxu0 0.0
    %987 = vmatprep.subr.mxu0 0.0
    %988 = vmatpush1.msra.mxu0 0.0
    %989 = vmatprep.subr.mxu0 0.0
    %990 = vmatpush1.msra.mxu0 0.0
    %991 = vmatprep.subr.mxu0 0.0
    %992 = vmatpush1.msra.mxu0 0.0
    %993 = vmatprep.subr.mxu0 0.0
    %994 = vmatpush1.msra.mxu0 0.0
    %995 = vmatprep.subr.mxu0 0.0
    %996 = vmatpush1.msra.mxu0 0.0
    %997 = vmatprep.subr.mxu0 0.0
    %998 = vmatpush1.msra.mxu0 0.0
    %999 = vmatprep.subr.mxu0 0.0
    %1000 = vmatpush1.msra.mxu0 %v565
    %1001 = vmatprep.subr.mxu0 0.0
    %1002 = vmatpush2.msra.mxu0 0.0
    %1003 = vmatprep.subr.mxu0 0.0
    %1004 = vmatpush2.msra.mxu0 0.0
    %1005 = vmatprep.subr.mxu0 0.0
    %1006 = vmatpush2.msra.mxu0 0.0
    %1007 = vmatprep.subr.mxu0 0.0
    %1008 = vmatpush2.msra.mxu0 0.0
    %1009 = vmatprep.subr.mxu0 0.0
    %1010 = vmatpush2.msra.mxu0 0.0
    %1011 = vmatprep.subr.mxu0 0.0
    %1012 = vmatpush2.msra.mxu0 0.0
    %1013 = vmatprep.subr.mxu0 0.0
    %1014 = vmatpush2.msra.mxu0 0.0
    %1015 = vmatprep.subr.mxu0 0.0
    %1016 = vmatpush2.msra.mxu0 0.0
    %1017 = vmatprep.subr.mxu0 0.0
    %1018 = vmatpush2.msra.mxu0 0.0
    %1019 = vmatprep.subr.mxu0 0.0
    %1020 = vmatpush2.msra.mxu0 0.0
    %1021 = vmatprep.subr.mxu0 0.0
    %1022 = vmatpush2.msra.mxu0 0.0
    %1023 = vmatprep.subr.mxu0 0.0
    %1024 = vmatpush2.msra.mxu0 0.0
    %1025 = vmatprep.subr.mxu0 0.0
    %1026 = vmatpush2.msra.mxu0 0.0
    %1027 = vmatprep.subr.mxu0 0.0
    %1028 = vmatpush2.msra.mxu0 0.0
    %1029 = vmatprep.subr.mxu0 0.0
    %1030 = vmatpush2.msra.mxu0 0.0
    %1031 = vmatprep.subr.mxu0 0.0
    %1032 = vmatpush2.msra.mxu0 0.0
    %1033 = vmatprep.mubr.f32.mxu0 0.0
    %1034 = vmatmul.mubr.f32.gmra.mxu0 %v958
    %v1035 = vpop.f32.mrf.mxu0
    %v1036 = vadd.f32 0.0, %v1035
    %v1037 = vpop.f32.mrf.mxu0
    %1038 = vmatprep.mubr.f32.mxu0 0.0
    %1039 = vmatmul.mubr.f32.gmra.mxu0 %v961
    %v1040 = vpop.f32.mrf.mxu0
    %v1041 = vadd.f32 0.0, %v1040
    %v1042 = vpop.f32.mrf.mxu0
    %1043 = vmatprep.mubr.f32.mxu0 0.0
    %1044 = vmatmul.mubr.f32.gmra.mxu0 %v964
    %v1045 = vpop.f32.mrf.mxu0
    %v1046 = vadd.f32 0.0, %v1045
    %v1047 = vpop.f32.mrf.mxu0
    %1048 = vmatprep.mubr.f32.mxu0 0.0
    %1049 = vmatmul.mubr.f32.gmra.mxu0 %v967
    %v1050 = vpop.f32.mrf.mxu0
    %v1051 = vadd.f32 0.0, %v1050
    %v1052 = vpop.f32.mrf.mxu0
    %1053 = vdwg.mxu0
    %v1055 = vsel %vm568, %v486, 0
    %v1058 = vsel %vm568, %v491, 0
    %v1061 = vsel %vm568, %v496, 0
    %v1064 = vsel %vm568, %v501, 0
    %1066 = vmatprep.subr.mxu0 0.0
    %1067 = vmatpush1.msra.mxu0 0.0
    %1068 = vmatprep.subr.mxu0 0.0
    %1069 = vmatpush1.msra.mxu0 0.0
    %1070 = vmatprep.subr.mxu0 0.0
    %1071 = vmatpush1.msra.mxu0 0.0
    %1072 = vmatprep.subr.mxu0 0.0
    %1073 = vmatpush1.msra.mxu0 0.0
    %1074 = vmatprep.subr.mxu0 0.0
    %1075 = vmatpush1.msra.mxu0 0.0
    %1076 = vmatprep.subr.mxu0 0.0
    %1077 = vmatpush1.msra.mxu0 0.0
    %1078 = vmatprep.subr.mxu0 0.0
    %1079 = vmatpush1.msra.mxu0 0.0
    %1080 = vmatprep.subr.mxu0 0.0
    %1081 = vmatpush1.msra.mxu0 0.0
    %1082 = vmatprep.subr.mxu0 0.0
    %1083 = vmatpush1.msra.mxu0 0.0
    %1084 = vmatprep.subr.mxu0 0.0
    %1085 = vmatpush1.msra.mxu0 0.0
    %1086 = vmatprep.subr.mxu0 0.0
    %1087 = vmatpush1.msra.mxu0 0.0
    %1088 = vmatprep.subr.mxu0 0.0
    %1089 = vmatpush1.msra.mxu0 0.0
    %1090 = vmatprep.subr.mxu0 0.0
    %1091 = vmatpush1.msra.mxu0 0.0
    %1092 = vmatprep.subr.mxu0 0.0
    %1093 = vmatpush1.msra.mxu0 0.0
    %1094 = vmatprep.subr.mxu0 0.0
    %1095 = vmatpush1.msra.mxu0 0.0
    %1096 = vmatprep.subr.mxu0 0.0
    %1097 = vmatpush1.msra.mxu0 %v564
    %1098 = vmatprep.subr.mxu0 0.0
    %1099 = vmatpush2.msra.mxu0 0.0
    %1100 = vmatprep.subr.mxu0 0.0
    %1101 = vmatpush2.msra.mxu0 0.0
    %1102 = vmatprep.subr.mxu0 0.0
    %1103 = vmatpush2.msra.mxu0 0.0
    %1104 = vmatprep.subr.mxu0 0.0
    %1105 = vmatpush2.msra.mxu0 0.0
    %1106 = vmatprep.subr.mxu0 0.0
    %1107 = vmatpush2.msra.mxu0 0.0
    %1108 = vmatprep.subr.mxu0 0.0
    %1109 = vmatpush2.msra.mxu0 0.0
    %1110 = vmatprep.subr.mxu0 0.0
    %1111 = vmatpush2.msra.mxu0 0.0
    %1112 = vmatprep.subr.mxu0 0.0
    %1113 = vmatpush2.msra.mxu0 0.0
    %1114 = vmatprep.subr.mxu0 0.0
    %1115 = vmatpush2.msra.mxu0 0.0
    %1116 = vmatprep.subr.mxu0 0.0
    %1117 = vmatpush2.msra.mxu0 0.0
    %1118 = vmatprep.subr.mxu0 0.0
    %1119 = vmatpush2.msra.mxu0 0.0
    %1120 = vmatprep.subr.mxu0 0.0
    %1121 = vmatpush2.msra.mxu0 0.0
    %1122 = vmatprep.subr.mxu0 0.0
    %1123 = vmatpush2.msra.mxu0 0.0
    %1124 = vmatprep.subr.mxu0 0.0
    %1125 = vmatpush2.msra.mxu0 0.0
    %1126 = vmatprep.subr.mxu0 0.0
    %1127 = vmatpush2.msra.mxu0 0.0
    %1128 = vmatprep.subr.mxu0 0.0
    %1129 = vmatpush2.msra.mxu0 0.0
    %1130 = vmatprep.mubr.f32.mxu0 0.0
    %1131 = vmatmul.mubr.f32.gmra.mxu0 %v1055
    %v1132 = vpop.f32.mrf.mxu0
    %v1133 = vadd.f32 %v1036, %v1132
    %v1134 = vpop.f32.mrf.mxu0
    %1135 = vmatprep.mubr.f32.mxu0 0.0
    %1136 = vmatmul.mubr.f32.gmra.mxu0 %v1058
    %v1137 = vpop.f32.mrf.mxu0
    %v1138 = vadd.f32 %v1041, %v1137
    %v1139 = vpop.f32.mrf.mxu0
    %1140 = vmatprep.mubr.f32.mxu0 0.0
    %1141 = vmatmul.mubr.f32.gmra.mxu0 %v1061
    %v1142 = vpop.f32.mrf.mxu0
    %v1143 = vadd.f32 %v1046, %v1142
    %v1144 = vpop.f32.mrf.mxu0
    %1145 = vmatprep.mubr.f32.mxu0 0.0
    %1146 = vmatmul.mubr.f32.gmra.mxu0 %v1064
    %v1147 = vpop.f32.mrf.mxu0
    %v1148 = vadd.f32 %v1051, %v1147
    %v1149 = vpop.f32.mrf.mxu0
    %1150 = vdwg.mxu0
    %v1152 = vsel %vm568, %v546, 0
    %v1155 = vsel %vm568, %v551, 0
    %v1158 = vsel %vm568, %v556, 0
    %v1161 = vsel %vm568, %v561, 0
    %1163 = vmatprep.subr.mxu0 0.0
    %1164 = vmatpush1.msra.mxu0 0.0
    %1165 = vmatprep.subr.mxu0 0.0
    %1166 = vmatpush1.msra.mxu0 0.0
    %1167 = vmatprep.subr.mxu0 0.0
    %1168 = vmatpush1.msra.mxu0 0.0
    %1169 = vmatprep.subr.mxu0 0.0
    %1170 = vmatpush1.msra.mxu0 0.0
    %1171 = vmatprep.subr.mxu0 0.0
    %1172 = vmatpush1.msra.mxu0 0.0
    %1173 = vmatprep.subr.mxu0 0.0
    %1174 = vmatpush1.msra.mxu0 0.0
    %1175 = vmatprep.subr.mxu0 0.0
    %1176 = vmatpush1.msra.mxu0 0.0
    %1177 = vmatprep.subr.mxu0 0.0
    %1178 = vmatpush1.msra.mxu0 0.0
    %1179 = vmatprep.subr.mxu0 0.0
    %1180 = vmatpush1.msra.mxu0 0.0
    %1181 = vmatprep.subr.mxu0 0.0
    %1182 = vmatpush1.msra.mxu0 0.0
    %1183 = vmatprep.subr.mxu0 0.0
    %1184 = vmatpush1.msra.mxu0 0.0
    %1185 = vmatprep.subr.mxu0 0.0
    %1186 = vmatpush1.msra.mxu0 0.0
    %1187 = vmatprep.subr.mxu0 0.0
    %1188 = vmatpush1.msra.mxu0 0.0
    %1189 = vmatprep.subr.mxu0 0.0
    %1190 = vmatpush1.msra.mxu0 0.0
    %1191 = vmatprep.subr.mxu0 0.0
    %1192 = vmatpush1.msra.mxu0 0.0
    %1193 = vmatprep.subr.mxu0 0.0
    %1194 = vmatpush1.msra.mxu0 %v565
    %1195 = vmatprep.subr.mxu0 0.0
    %1196 = vmatpush2.msra.mxu0 0.0
    %1197 = vmatprep.subr.mxu0 0.0
    %1198 = vmatpush2.msra.mxu0 0.0
    %1199 = vmatprep.subr.mxu0 0.0
    %1200 = vmatpush2.msra.mxu0 0.0
    %1201 = vmatprep.subr.mxu0 0.0
    %1202 = vmatpush2.msra.mxu0 0.0
    %1203 = vmatprep.subr.mxu0 0.0
    %1204 = vmatpush2.msra.mxu0 0.0
    %1205 = vmatprep.subr.mxu0 0.0
    %1206 = vmatpush2.msra.mxu0 0.0
    %1207 = vmatprep.subr.mxu0 0.0
    %1208 = vmatpush2.msra.mxu0 0.0
    %1209 = vmatprep.subr.mxu0 0.0
    %1210 = vmatpush2.msra.mxu0 0.0
    %1211 = vmatprep.subr.mxu0 0.0
    %1212 = vmatpush2.msra.mxu0 0.0
    %1213 = vmatprep.subr.mxu0 0.0
    %1214 = vmatpush2.msra.mxu0 0.0
    %1215 = vmatprep.subr.mxu0 0.0
    %1216 = vmatpush2.msra.mxu0 0.0
    %1217 = vmatprep.subr.mxu0 0.0
    %1218 = vmatpush2.msra.mxu0 0.0
    %1219 = vmatprep.subr.mxu0 0.0
    %1220 = vmatpush2.msra.mxu0 0.0
    %1221 = vmatprep.subr.mxu0 0.0
    %1222 = vmatpush2.msra.mxu0 0.0
    %1223 = vmatprep.subr.mxu0 0.0
    %1224 = vmatpush2.msra.mxu0 0.0
    %1225 = vmatprep.subr.mxu0 0.0
    %1226 = vmatpush2.msra.mxu0 0.0
    %1227 = vmatprep.mubr.f32.mxu0 0.0
    %1228 = vmatmul.mubr.f32.gmra.mxu0 %v1152
    %v1229 = vpop.f32.mrf.mxu0
    %v1230 = vadd.f32 0.0, %v1229
    %v1231 = vpop.f32.mrf.mxu0
    %1232 = vmatprep.mubr.f32.mxu0 0.0
    %1233 = vmatmul.mubr.f32.gmra.mxu0 %v1155
    %v1234 = vpop.f32.mrf.mxu0
    %v1235 = vadd.f32 0.0, %v1234
    %v1236 = vpop.f32.mrf.mxu0
    %1237 = vmatprep.mubr.f32.mxu0 0.0
    %1238 = vmatmul.mubr.f32.gmra.mxu0 %v1158
    %v1239 = vpop.f32.mrf.mxu0
    %v1240 = vadd.f32 0.0, %v1239
    %v1241 = vpop.f32.mrf.mxu0
    %1242 = vmatprep.mubr.f32.mxu0 0.0
    %1243 = vmatmul.mubr.f32.gmra.mxu0 %v1161
    %v1244 = vpop.f32.mrf.mxu0
    %v1245 = vadd.f32 0.0, %v1244
    %v1246 = vpop.f32.mrf.mxu0
    %1247 = vdwg.mxu0
    %v1249 = vsel %vm568, %v526, 0
    %v1252 = vsel %vm568, %v531, 0
    %v1255 = vsel %vm568, %v536, 0
    %v1258 = vsel %vm568, %v541, 0
    %1260 = vmatprep.subr.mxu0 0.0
    %1261 = vmatpush1.msra.mxu0 0.0
    %1262 = vmatprep.subr.mxu0 0.0
    %1263 = vmatpush1.msra.mxu0 0.0
    %1264 = vmatprep.subr.mxu0 0.0
    %1265 = vmatpush1.msra.mxu0 0.0
    %1266 = vmatprep.subr.mxu0 0.0
    %1267 = vmatpush1.msra.mxu0 0.0
    %1268 = vmatprep.subr.mxu0 0.0
    %1269 = vmatpush1.msra.mxu0 0.0
    %1270 = vmatprep.subr.mxu0 0.0
    %1271 = vmatpush1.msra.mxu0 0.0
    %1272 = vmatprep.subr.mxu0 0.0
    %1273 = vmatpush1.msra.mxu0 0.0
    %1274 = vmatprep.subr.mxu0 0.0
    %1275 = vmatpush1.msra.mxu0 0.0
    %1276 = vmatprep.subr.mxu0 0.0
    %1277 = vmatpush1.msra.mxu0 0.0
    %1278 = vmatprep.subr.mxu0 0.0
    %1279 = vmatpush1.msra.mxu0 0.0
    %1280 = vmatprep.subr.mxu0 0.0
    %1281 = vmatpush1.msra.mxu0 0.0
    %1282 = vmatprep.subr.mxu0 0.0
    %1283 = vmatpush1.msra.mxu0 0.0
    %1284 = vmatprep.subr.mxu0 0.0
    %1285 = vmatpush1.msra.mxu0 0.0
    %1286 = vmatprep.subr.mxu0 0.0
    %1287 = vmatpush1.msra.mxu0 0.0
    %1288 = vmatprep.subr.mxu0 0.0
    %1289 = vmatpush1.msra.mxu0 0.0
    %1290 = vmatprep.subr.mxu0 0.0
    %1291 = vmatpush1.msra.mxu0 %v564
    %1292 = vmatprep.subr.mxu0 0.0
    %1293 = vmatpush2.msra.mxu0 0.0
    %1294 = vmatprep.subr.mxu0 0.0
    %1295 = vmatpush2.msra.mxu0 0.0
    %1296 = vmatprep.subr.mxu0 0.0
    %1297 = vmatpush2.msra.mxu0 0.0
    %1298 = vmatprep.subr.mxu0 0.0
    %1299 = vmatpush2.msra.mxu0 0.0
    %1300 = vmatprep.subr.mxu0 0.0
    %1301 = vmatpush2.msra.mxu0 0.0
    %1302 = vmatprep.subr.mxu0 0.0
    %1303 = vmatpush2.msra.mxu0 0.0
    %1304 = vmatprep.subr.mxu0 0.0
    %1305 = vmatpush2.msra.mxu0 0.0
    %1306 = vmatprep.subr.mxu0 0.0
    %1307 = vmatpush2.msra.mxu0 0.0
    %1308 = vmatprep.subr.mxu0 0.0
    %1309 = vmatpush2.msra.mxu0 0.0
    %1310 = vmatprep.subr.mxu0 0.0
    %1311 = vmatpush2.msra.mxu0 0.0
    %1312 = vmatprep.subr.mxu0 0.0
    %1313 = vmatpush2.msra.mxu0 0.0
    %1314 = vmatprep.subr.mxu0 0.0
    %1315 = vmatpush2.msra.mxu0 0.0
    %1316 = vmatprep.subr.mxu0 0.0
    %1317 = vmatpush2.msra.mxu0 0.0
    %1318 = vmatprep.subr.mxu0 0.0
    %1319 = vmatpush2.msra.mxu0 0.0
    %1320 = vmatprep.subr.mxu0 0.0
    %1321 = vmatpush2.msra.mxu0 0.0
    %1322 = vmatprep.subr.mxu0 0.0
    %1323 = vmatpush2.msra.mxu0 0.0
    %1324 = vmatprep.mubr.f32.mxu0 0.0
    %1325 = vmatmul.mubr.f32.gmra.mxu0 %v1249
    %v1326 = vpop.f32.mrf.mxu0
    %v1327 = vadd.f32 %v1230, %v1326
    %v1328 = vpop.f32.mrf.mxu0
    %1329 = vmatprep.mubr.f32.mxu0 0.0
    %1330 = vmatmul.mubr.f32.gmra.mxu0 %v1252
    %v1331 = vpop.f32.mrf.mxu0
    %v1332 = vadd.f32 %v1235, %v1331
    %v1333 = vpop.f32.mrf.mxu0
    %1334 = vmatprep.mubr.f32.mxu0 0.0
    %1335 = vmatmul.mubr.f32.gmra.mxu0 %v1255
    %v1336 = vpop.f32.mrf.mxu0
    %v1337 = vadd.f32 %v1240, %v1336
    %v1338 = vpop.f32.mrf.mxu0
    %1339 = vmatprep.mubr.f32.mxu0 0.0
    %1340 = vmatmul.mubr.f32.gmra.mxu0 %v1258
    %v1341 = vpop.f32.mrf.mxu0
    %v1342 = vadd.f32 %v1245, %v1341
    %v1343 = vpop.f32.mrf.mxu0
    %1344 = vdwg.mxu0
    %v1345 = vsel %vm242, %v745, 0.0
    %v1346 = vsel %vm242, %v750, 0.0
    %v1347 = vadd.f32 %v1345, %v1346
    %v1348 = vsel %vm242, %v755, 0.0
    %v1349 = vadd.f32 %v1347, %v1348
    %v1350 = vsel %vm242, %v760, 0.0
    %v1351 = vadd.f32 %v1349, %v1350
    %v1352 = vsel %vm242, %v939, 0.0
    %v1353 = vadd.f32 %v1351, %v1352
    %v1354 = vsel %vm242, %v944, 0.0
    %v1355 = vadd.f32 %v1353, %v1354
    %v1356 = vsel %vm242, %v949, 0.0
    %v1357 = vadd.f32 %v1355, %v1356
    %v1358 = vsel %vm242, %v954, 0.0
    %v1359 = vadd.f32 %v1357, %v1358
    %v1360 = vsel %vm242, %v1133, 0.0
    %v1361 = vadd.f32 %v1359, %v1360
    %v1362 = vsel %vm242, %v1138, 0.0
    %v1363 = vadd.f32 %v1361, %v1362
    %v1364 = vsel %vm242, %v1143, 0.0
    %v1365 = vadd.f32 %v1363, %v1364
    %v1366 = vsel %vm242, %v1148, 0.0
    %v1367 = vadd.f32 %v1365, %v1366
    %v1368 = vsel %vm242, %v1327, 0.0
    %v1369 = vadd.f32 %v1367, %v1368
    %v1370 = vsel %vm242, %v1332, 0.0
    %v1371 = vadd.f32 %v1369, %v1370
    %v1372 = vsel %vm242, %v1337, 0.0
    %v1373 = vadd.f32 %v1371, %v1372
    %v1374 = vsel %vm242, %v1342, 0.0
    %v1375 = vadd.f32 %v1373, %v1374
    %v1376 = vrot.slane %v1375, 4
    %v1377 = vadd.f32 %v1375, %v1376
    %v1378 = vrot.slane %v1377, 2
    %v1379 = vadd.f32 %v1377, %v1378
    %v1380 = vrot.slane %v1379, 1
    %v1381 = vadd.f32 %v1379, %v1380
    %v1382 = vrcp.pop 128.0
    %v1383 = vmul.f32 %v1381, %v1382
    %v1384 = vsub.f32 %v745, %v1383
    %v1385 = vsub.f32 %v750, %v1383
    %v1386 = vsub.f32 %v755, %v1383
    %v1387 = vsub.f32 %v760, %v1383
    %v1388 = vsub.f32 %v939, %v1383
    %v1389 = vsub.f32 %v944, %v1383
    %v1390 = vsub.f32 %v949, %v1383
    %v1391 = vsub.f32 %v954, %v1383
    %v1392 = vsub.f32 %v1133, %v1383
    %v1393 = vsub.f32 %v1138, %v1383
    %v1394 = vsub.f32 %v1143, %v1383
    %v1395 = vsub.f32 %v1148, %v1383
    %v1396 = vsub.f32 %v1327, %v1383
    %v1397 = vsub.f32 %v1332, %v1383
    %v1398 = vsub.f32 %v1337, %v1383
    %v1399 = vsub.f32 %v1342, %v1383
    %v1400 = vmul.f32 %v1384, %v1384
    %v1401 = vmul.f32 %v1385, %v1385
    %v1402 = vmul.f32 %v1386, %v1386
    %v1403 = vmul.f32 %v1387, %v1387
    %v1404 = vmul.f32 %v1388, %v1388
    %v1405 = vmul.f32 %v1389, %v1389
    %v1406 = vmul.f32 %v1390, %v1390
    %v1407 = vmul.f32 %v1391, %v1391
    %v1408 = vmul.f32 %v1392, %v1392
    %v1409 = vmul.f32 %v1393, %v1393
    %v1410 = vmul.f32 %v1394, %v1394
    %v1411 = vmul.f32 %v1395, %v1395
    %v1412 = vmul.f32 %v1396, %v1396
    %v1413 = vmul.f32 %v1397, %v1397
    %v1414 = vmul.f32 %v1398, %v1398
    %v1415 = vmul.f32 %v1399, %v1399
    %v1416 = vsel %vm242, %v1400, 0.0
    %v1417 = vsel %vm242, %v1401, 0.0
    %v1418 = vadd.f32 %v1416, %v1417
    %v1419 = vsel %vm242, %v1402, 0.0
    %v1420 = vadd.f32 %v1418, %v1419
    %v1421 = vsel %vm242, %v1403, 0.0
    %v1422 = vadd.f32 %v1420, %v1421
    %v1423 = vsel %vm242, %v1404, 0.0
    %v1424 = vadd.f32 %v1422, %v1423
    %v1425 = vsel %vm242, %v1405, 0.0
    %v1426 = vadd.f32 %v1424, %v1425
    %v1427 = vsel %vm242, %v1406, 0.0
    %v1428 = vadd.f32 %v1426, %v1427
    %v1429 = vsel %vm242, %v1407, 0.0
    %v1430 = vadd.f32 %v1428, %v1429
    %v1431 = vsel %vm242, %v1408, 0.0
    %v1432 = vadd.f32 %v1430, %v1431
    %v1433 = vsel %vm242, %v1409, 0.0
    %v1434 = vadd.f32 %v1432, %v1433
    %v1435 = vsel %vm242, %v1410, 0.0
    %v1436 = vadd.f32 %v1434, %v1435
    %v1437 = vsel %vm242, %v1411, 0.0
    %v1438 = vadd.f32 %v1436, %v1437
    %v1439 = vsel %vm242, %v1412, 0.0
    %v1440 = vadd.f32 %v1438, %v1439
    %v1441 = vsel %vm242, %v1413, 0.0
    %v1442 = vadd.f32 %v1440, %v1441
    %v1443 = vsel %vm242, %v1414, 0.0
    %v1444 = vadd.f32 %v1442, %v1443
    %v1445 = vsel %vm242, %v1415, 0.0
    %v1446 = vadd.f32 %v1444, %v1445
    %v1447 = vrot.slane %v1446, 4
    %v1448 = vadd.f32 %v1446, %v1447
    %v1449 = vrot.slane %v1448, 2
    %v1450 = vadd.f32 %v1448, %v1449
    %v1451 = vrot.slane %v1450, 1
    %v1452 = vadd.f32 %v1450, %v1451
    %v1453 = vmul.f32 %v1452, %v1382
    %v1454 = vadd.f32 %v1453, 1e-05
    %v1455 = vrsqrt.pop %v1454
    %v1456 = vmul.f32 %v1384, %v1455
    %v1457 = vmul.f32 %v1385, %v1455
    %v1458 = vmul.f32 %v1386, %v1455
    %v1459 = vmul.f32 %v1387, %v1455
    %v1460 = vmul.f32 %v1388, %v1455
    %v1461 = vmul.f32 %v1389, %v1455
    %v1462 = vmul.f32 %v1390, %v1455
    %v1463 = vmul.f32 %v1391, %v1455
    %v1464 = vmul.f32 %v1392, %v1455
    %v1465 = vmul.f32 %v1393, %v1455
    %v1466 = vmul.f32 %v1394, %v1455
    %v1467 = vmul.f32 %v1395, %v1455
    %v1468 = vmul.f32 %v1396, %v1455
    %v1469 = vmul.f32 %v1397, %v1455
    %v1470 = vmul.f32 %v1398, %v1455
    %v1471 = vmul.f32 %v1399, %v1455
    %v1472 = vlaneseq
    %v1473 = vshrl.u32 %v1472, 7
    %v1474 = vsub.s32 0, %v1473
    %v1475 = vrot.slane %v566, %v1474
    %v1476 = vmul.f32 %v1475, %v1456
    %v1477 = vmul.f32 %v1475, %v1457
    %v1478 = vmul.f32 %v1475, %v1458
    %v1479 = vmul.f32 %v1475, %v1459
    %v1480 = vmul.f32 %v1475, %v1460
    %v1481 = vmul.f32 %v1475, %v1461
    %v1482 = vmul.f32 %v1475, %v1462
    %v1483 = vmul.f32 %v1475, %v1463
    %v1484 = vmul.f32 %v1475, %v1464
    %v1485 = vmul.f32 %v1475, %v1465
    %v1486 = vmul.f32 %v1475, %v1466
    %v1487 = vmul.f32 %v1475, %v1467
    %v1488 = vmul.f32 %v1475, %v1468
    %v1489 = vmul.f32 %v1475, %v1469
    %v1490 = vmul.f32 %v1475, %v1470
    %v1491 = vmul.f32 %v1475, %v1471
    %v1492 = vlaneseq
    %v1493 = vshrl.u32 %v1492, 7
    %v1494 = vsub.s32 0, %v1493
    %v1495 = vrot.slane %v567, %v1494
    %v1496 = vadd.f32 %v1476, %v1495
    %v1497 = vadd.f32 %v1477, %v1495
    %v1498 = vadd.f32 %v1478, %v1495
    %v1499 = vadd.f32 %v1479, %v1495
    %v1500 = vadd.f32 %v1480, %v1495
    %v1501 = vadd.f32 %v1481, %v1495
    %v1502 = vadd.f32 %v1482, %v1495
    %v1503 = vadd.f32 %v1483, %v1495
    %v1504 = vadd.f32 %v1484, %v1495
    %v1505 = vadd.f32 %v1485, %v1495
    %v1506 = vadd.f32 %v1486, %v1495
    %v1507 = vadd.f32 %v1487, %v1495
    %v1508 = vadd.f32 %v1488, %v1495
    %v1509 = vadd.f32 %v1489, %v1495
    %v1510 = vadd.f32 %v1490, %v1495
    %v1511 = vadd.f32 %v1491, %v1495
    %v1512 = vtanh.pop %v1496
    %v1513 = vtanh.pop %v1497
    %v1514 = vtanh.pop %v1498
    %v1515 = vtanh.pop %v1499
    %v1516 = vtanh.pop %v1500
    %v1517 = vtanh.pop %v1501
    %v1518 = vtanh.pop %v1502
    %v1519 = vtanh.pop %v1503
    %v1520 = vtanh.pop %v1504
    %v1521 = vtanh.pop %v1505
    %v1522 = vtanh.pop %v1506
    %v1523 = vtanh.pop %v1507
    %v1524 = vtanh.pop %v1508
    %v1525 = vtanh.pop %v1509
    %v1526 = vtanh.pop %v1510
    %v1527 = vtanh.pop %v1511
    %v1528 = vld [vmem:[%s1 + $0x30] sm:$0xff]
    %v1529 = vld [vmem:[%s1 + $0x38] sm:$0xff]
    %v1530 = vld [vmem:[%s1 + $0x40] sm:$0xff]
    %v1531 = vld [vmem:[%s1 + $0x48] sm:$0xff]
    %v1532 = vld [vmem:[%s1 + $0x50] sm:$0xff]
    %v1533 = vld [vmem:[%s1 + $0x58] sm:$0xff]
    %v1534 = vld [vmem:[%s1 + $0x60] sm:$0xff]
    %v1535 = vld [vmem:[%s1 + $0x68] sm:$0xff]
    %v1536 = vld [vmem:[%s1 + $0xe0] sm:$0x1]
    %v1537 = vld [vmem:[%s1 + $0xe8] sm:$0x1]
    %v1539 = vsel %vm242, %v1516, 0
    %v1542 = vsel %vm242, %v1517, 0
    %v1545 = vsel %vm242, %v1518, 0
    %v1548 = vsel %vm242, %v1519, 0
    %1550 = vmatprep.subr.mxu0 0.0
    %1551 = vmatpush1.msra.mxu0 0.0
    %1552 = vmatprep.subr.mxu0 0.0
    %1553 = vmatpush1.msra.mxu0 0.0
    %1554 = vmatprep.subr.mxu0 0.0
    %1555 = vmatpush1.msra.mxu0 0.0
    %1556 = vmatprep.subr.mxu0 0.0
    %1557 = vmatpush1.msra.mxu0 0.0
    %1558 = vmatprep.subr.mxu0 0.0
    %1559 = vmatpush1.msra.mxu0 0.0
    %1560 = vmatprep.subr.mxu0 0.0
    %1561 = vmatpush1.msra.mxu0 0.0
    %1562 = vmatprep.subr.mxu0 0.0
    %1563 = vmatpush1.msra.mxu0 0.0
    %1564 = vmatprep.subr.mxu0 0.0
    %1565 = vmatpush1.msra.mxu0 0.0
    %1566 = vmatprep.subr.mxu0 0.0
    %1567 = vmatpush1.msra.mxu0 0.0
    %1568 = vmatprep.subr.mxu0 0.0
    %1569 = vmatpush1.msra.mxu0 0.0
    %1570 = vmatprep.subr.mxu0 0.0
    %1571 = vmatpush1.msra.mxu0 0.0
    %1572 = vmatprep.subr.mxu0 0.0
    %1573 = vmatpush1.msra.mxu0 0.0
    %1574 = vmatprep.subr.mxu0 0.0
    %1575 = vmatpush1.msra.mxu0 %v1535
    %1576 = vmatprep.subr.mxu0 0.0
    %1577 = vmatpush1.msra.mxu0 %v1534
    %1578 = vmatprep.subr.mxu0 0.0
    %1579 = vmatpush1.msra.mxu0 %v1533
    %1580 = vmatprep.subr.mxu0 0.0
    %1581 = vmatpush1.msra.mxu0 %v1532
    %1582 = vmatprep.subr.mxu0 0.0
    %1583 = vmatpush2.msra.mxu0 0.0
    %1584 = vmatprep.subr.mxu0 0.0
    %1585 = vmatpush2.msra.mxu0 0.0
    %1586 = vmatprep.subr.mxu0 0.0
    %1587 = vmatpush2.msra.mxu0 0.0
    %1588 = vmatprep.subr.mxu0 0.0
    %1589 = vmatpush2.msra.mxu0 0.0
    %1590 = vmatprep.subr.mxu0 0.0
    %1591 = vmatpush2.msra.mxu0 0.0
    %1592 = vmatprep.subr.mxu0 0.0
    %1593 = vmatpush2.msra.mxu0 0.0
    %1594 = vmatprep.subr.mxu0 0.0
    %1595 = vmatpush2.msra.mxu0 0.0
    %1596 = vmatprep.subr.mxu0 0.0
    %1597 = vmatpush2.msra.mxu0 0.0
    %1598 = vmatprep.subr.mxu0 0.0
    %1599 = vmatpush2.msra.mxu0 0.0
    %1600 = vmatprep.subr.mxu0 0.0
    %1601 = vmatpush2.msra.mxu0 0.0
    %1602 = vmatprep.subr.mxu0 0.0
    %1603 = vmatpush2.msra.mxu0 0.0
    %1604 = vmatprep.subr.mxu0 0.0
    %1605 = vmatpush2.msra.mxu0 0.0
    %1606 = vmatprep.subr.mxu0 0.0
    %1607 = vmatpush2.msra.mxu0 0.0
    %1608 = vmatprep.subr.mxu0 0.0
    %1609 = vmatpush2.msra.mxu0 0.0
    %1610 = vmatprep.subr.mxu0 0.0
    %1611 = vmatpush2.msra.mxu0 0.0
    %1612 = vmatprep.subr.mxu0 0.0
    %1613 = vmatpush2.msra.mxu0 0.0
    %1614 = vmatprep.mubr.f32.mxu0 0.0
    %1615 = vmatmul.mubr.f32.gmra.mxu0 %v1539
    %v1616 = vpop.f32.mrf.mxu0
    %v1617 = vadd.f32 0.0, %v1616
    %v1618 = vpop.f32.mrf.mxu0
    %1619 = vmatprep.mubr.f32.mxu0 0.0
    %1620 = vmatmul.mubr.f32.gmra.mxu0 %v1542
    %v1621 = vpop.f32.mrf.mxu0
    %v1622 = vadd.f32 0.0, %v1621
    %v1623 = vpop.f32.mrf.mxu0
    %1624 = vmatprep.mubr.f32.mxu0 0.0
    %1625 = vmatmul.mubr.f32.gmra.mxu0 %v1545
    %v1626 = vpop.f32.mrf.mxu0
    %v1627 = vadd.f32 0.0, %v1626
    %v1628 = vpop.f32.mrf.mxu0
    %1629 = vmatprep.mubr.f32.mxu0 0.0
    %1630 = vmatmul.mubr.f32.gmra.mxu0 %v1548
    %v1631 = vpop.f32.mrf.mxu0
    %v1632 = vadd.f32 0.0, %v1631
    %v1633 = vpop.f32.mrf.mxu0
    %1634 = vdwg.mxu0
    %v1636 = vsel %vm242, %v1512, 0
    %v1639 = vsel %vm242, %v1513, 0
    %v1642 = vsel %vm242, %v1514, 0
    %v1645 = vsel %vm242, %v1515, 0
    %1647 = vmatprep.subr.mxu0 0.0
    %1648 = vmatpush1.msra.mxu0 0.0
    %1649 = vmatprep.subr.mxu0 0.0
    %1650 = vmatpush1.msra.mxu0 0.0
    %1651 = vmatprep.subr.mxu0 0.0
    %1652 = vmatpush1.msra.mxu0 0.0
    %1653 = vmatprep.subr.mxu0 0.0
    %1654 = vmatpush1.msra.mxu0 0.0
    %1655 = vmatprep.subr.mxu0 0.0
    %1656 = vmatpush1.msra.mxu0 0.0
    %1657 = vmatprep.subr.mxu0 0.0
    %1658 = vmatpush1.msra.mxu0 0.0
    %1659 = vmatprep.subr.mxu0 0.0
    %1660 = vmatpush1.msra.mxu0 0.0
    %1661 = vmatprep.subr.mxu0 0.0
    %1662 = vmatpush1.msra.mxu0 0.0
    %1663 = vmatprep.subr.mxu0 0.0
    %1664 = vmatpush1.msra.mxu0 0.0
    %1665 = vmatprep.subr.mxu0 0.0
    %1666 = vmatpush1.msra.mxu0 0.0
    %1667 = vmatprep.subr.mxu0 0.0
    %1668 = vmatpush1.msra.mxu0 0.0
    %1669 = vmatprep.subr.mxu0 0.0
    %1670 = vmatpush1.msra.mxu0 0.0
    %1671 = vmatprep.subr.mxu0 0.0
    %1672 = vmatpush1.msra.mxu0 %v1531
    %1673 = vmatprep.subr.mxu0 0.0
    %1674 = vmatpush1.msra.mxu0 %v1530
    %1675 = vmatprep.subr.mxu0 0.0
    %1676 = vmatpush1.msra.mxu0 %v1529
    %1677 = vmatprep.subr.mxu0 0.0
    %1678 = vmatpush1.msra.mxu0 %v1528
    %1679 = vmatprep.subr.mxu0 0.0
    %1680 = vmatpush2.msra.mxu0 0.0
    %1681 = vmatprep.subr.mxu0 0.0
    %1682 = vmatpush2.msra.mxu0 0.0
    %1683 = vmatprep.subr.mxu0 0.0
    %1684 = vmatpush2.msra.mxu0 0.0
    %1685 = vmatprep.subr.mxu0 0.0
    %1686 = vmatpush2.msra.mxu0 0.0
    %1687 = vmatprep.subr.mxu0 0.0
    %1688 = vmatpush2.msra.mxu0 0.0
    %1689 = vmatprep.subr.mxu0 0.0
    %1690 = vmatpush2.msra.mxu0 0.0
    %1691 = vmatprep.subr.mxu0 0.0
    %1692 = vmatpush2.msra.mxu0 0.0
    %1693 = vmatprep.subr.mxu0 0.0
    %1694 = vmatpush2.msra.mxu0 0.0
    %1695 = vmatprep.subr.mxu0 0.0
    %1696 = vmatpush2.msra.mxu0 0.0
    %1697 = vmatprep.subr.mxu0 0.0
    %1698 = vmatpush2.msra.mxu0 0.0
    %1699 = vmatprep.subr.mxu0 0.0
    %1700 = vmatpush2.msra.mxu0 0.0
    %1701 = vmatprep.subr.mxu0 0.0
    %1702 = vmatpush2.msra.mxu0 0.0
    %1703 = vmatprep.subr.mxu0 0.0
    %1704 = vmatpush2.msra.mxu0 0.0
    %1705 = vmatprep.subr.mxu0 0.0
    %1706 = vmatpush2.msra.mxu0 0.0
    %1707 = vmatprep.subr.mxu0 0.0
    %1708 = vmatpush2.msra.mxu0 0.0
    %1709 = vmatprep.subr.mxu0 0.0
    %1710 = vmatpush2.msra.mxu0 0.0
    %1711 = vmatprep.mubr.f32.mxu0 0.0
    %1712 = vmatmul.mubr.f32.gmra.mxu0 %v1636
    %v1713 = vpop.f32.mrf.mxu0
    %v1714 = vadd.f32 %v1617, %v1713
    %v1715 = vpop.f32.mrf.mxu0
    %1716 = vmatprep.mubr.f32.mxu0 0.0
    %1717 = vmatmul.mubr.f32.gmra.mxu0 %v1639
    %v1718 = vpop.f32.mrf.mxu0
    %v1719 = vadd.f32 %v1622, %v1718
    %v1720 = vpop.f32.mrf.mxu0
    %1721 = vmatprep.mubr.f32.mxu0 0.0
    %1722 = vmatmul.mubr.f32.gmra.mxu0 %v1642
    %v1723 = vpop.f32.mrf.mxu0
    %v1724 = vadd.f32 %v1627, %v1723
    %v1725 = vpop.f32.mrf.mxu0
    %1726 = vmatprep.mubr.f32.mxu0 0.0
    %1727 = vmatmul.mubr.f32.gmra.mxu0 %v1645
    %v1728 = vpop.f32.mrf.mxu0
    %v1729 = vadd.f32 %v1632, %v1728
    %v1730 = vpop.f32.mrf.mxu0
    %1731 = vdwg.mxu0
    %v1733 = vsel %vm242, %v1524, 0
    %v1736 = vsel %vm242, %v1525, 0
    %v1739 = vsel %vm242, %v1526, 0
    %v1742 = vsel %vm242, %v1527, 0
    %1744 = vmatprep.subr.mxu0 0.0
    %1745 = vmatpush1.msra.mxu0 0.0
    %1746 = vmatprep.subr.mxu0 0.0
    %1747 = vmatpush1.msra.mxu0 0.0
    %1748 = vmatprep.subr.mxu0 0.0
    %1749 = vmatpush1.msra.mxu0 0.0
    %1750 = vmatprep.subr.mxu0 0.0
    %1751 = vmatpush1.msra.mxu0 0.0
    %1752 = vmatprep.subr.mxu0 0.0
    %1753 = vmatpush1.msra.mxu0 0.0
    %1754 = vmatprep.subr.mxu0 0.0
    %1755 = vmatpush1.msra.mxu0 0.0
    %1756 = vmatprep.subr.mxu0 0.0
    %1757 = vmatpush1.msra.mxu0 0.0
    %1758 = vmatprep.subr.mxu0 0.0
    %1759 = vmatpush1.msra.mxu0 0.0
    %1760 = vmatprep.subr.mxu0 0.0
    %1761 = vmatpush1.msra.mxu0 0.0
    %1762 = vmatprep.subr.mxu0 0.0
    %1763 = vmatpush1.msra.mxu0 0.0
    %1764 = vmatprep.subr.mxu0 0.0
    %1765 = vmatpush1.msra.mxu0 0.0
    %1766 = vmatprep.subr.mxu0 0.0
    %1767 = vmatpush1.msra.mxu0 0.0
    %1768 = vmatprep.subr.mxu0 0.0
    %1769 = vmatpush1.msra.mxu0 %v1535
    %1770 = vmatprep.subr.mxu0 0.0
    %1771 = vmatpush1.msra.mxu0 %v1534
    %1772 = vmatprep.subr.mxu0 0.0
    %1773 = vmatpush1.msra.mxu0 %v1533
    %1774 = vmatprep.subr.mxu0 0.0
    %1775 = vmatpush1.msra.mxu0 %v1532
    %1776 = vmatprep.subr.mxu0 0.0
    %1777 = vmatpush2.msra.mxu0 0.0
    %1778 = vmatprep.subr.mxu0 0.0
    %1779 = vmatpush2.msra.mxu0 0.0
    %1780 = vmatprep.subr.mxu0 0.0
    %1781 = vmatpush2.msra.mxu0 0.0
    %1782 = vmatprep.subr.mxu0 0.0
    %1783 = vmatpush2.msra.mxu0 0.0
    %1784 = vmatprep.subr.mxu0 0.0
    %1785 = vmatpush2.msra.mxu0 0.0
    %1786 = vmatprep.subr.mxu0 0.0
    %1787 = vmatpush2.msra.mxu0 0.0
    %1788 = vmatprep.subr.mxu0 0.0
    %1789 = vmatpush2.msra.mxu0 0.0
    %1790 = vmatprep.subr.mxu0 0.0
    %1791 = vmatpush2.msra.mxu0 0.0
    %1792 = vmatprep.subr.mxu0 0.0
    %1793 = vmatpush2.msra.mxu0 0.0
    %1794 = vmatprep.subr.mxu0 0.0
    %1795 = vmatpush2.msra.mxu0 0.0
    %1796 = vmatprep.subr.mxu0 0.0
    %1797 = vmatpush2.msra.mxu0 0.0
    %1798 = vmatprep.subr.mxu0 0.0
    %1799 = vmatpush2.msra.mxu0 0.0
    %1800 = vmatprep.subr.mxu0 0.0
    %1801 = vmatpush2.msra.mxu0 0.0
    %1802 = vmatprep.subr.mxu0 0.0
    %1803 = vmatpush2.msra.mxu0 0.0
    %1804 = vmatprep.subr.mxu0 0.0
    %1805 = vmatpush2.msra.mxu0 0.0
    %1806 = vmatprep.subr.mxu0 0.0
    %1807 = vmatpush2.msra.mxu0 0.0
    %1808 = vmatprep.mubr.f32.mxu0 0.0
    %1809 = vmatmul.mubr.f32.gmra.mxu0 %v1733
    %v1810 = vpop.f32.mrf.mxu0
    %v1811 = vadd.f32 0.0, %v1810
    %v1812 = vpop.f32.mrf.mxu0
    %1813 = vmatprep.mubr.f32.mxu0 0.0
    %1814 = vmatmul.mubr.f32.gmra.mxu0 %v1736
    %v1815 = vpop.f32.mrf.mxu0
    %v1816 = vadd.f32 0.0, %v1815
    %v1817 = vpop.f32.mrf.mxu0
    %1818 = vmatprep.mubr.f32.mxu0 0.0
    %1819 = vmatmul.mubr.f32.gmra.mxu0 %v1739
    %v1820 = vpop.f32.mrf.mxu0
    %v1821 = vadd.f32 0.0, %v1820
    %v1822 = vpop.f32.mrf.mxu0
    %1823 = vmatprep.mubr.f32.mxu0 0.0
    %1824 = vmatmul.mubr.f32.gmra.mxu0 %v1742
    %v1825 = vpop.f32.mrf.mxu0
    %v1826 = vadd.f32 0.0, %v1825
    %v1827 = vpop.f32.mrf.mxu0
    %1828 = vdwg.mxu0
    %v1830 = vsel %vm242, %v1520, 0
    %v1833 = vsel %vm242, %v1521, 0
    %v1836 = vsel %vm242, %v1522, 0
    %v1839 = vsel %vm242, %v1523, 0
    %1841 = vmatprep.subr.mxu0 0.0
    %1842 = vmatpush1.msra.mxu0 0.0
    %1843 = vmatprep.subr.mxu0 0.0
    %1844 = vmatpush1.msra.mxu0 0.0
    %1845 = vmatprep.subr.mxu0 0.0
    %1846 = vmatpush1.msra.mxu0 0.0
    %1847 = vmatprep.subr.mxu0 0.0
    %1848 = vmatpush1.msra.mxu0 0.0
    %1849 = vmatprep.subr.mxu0 0.0
    %1850 = vmatpush1.msra.mxu0 0.0
    %1851 = vmatprep.subr.mxu0 0.0
    %1852 = vmatpush1.msra.mxu0 0.0
    %1853 = vmatprep.subr.mxu0 0.0
    %1854 = vmatpush1.msra.mxu0 0.0
    %1855 = vmatprep.subr.mxu0 0.0
    %1856 = vmatpush1.msra.mxu0 0.0
    %1857 = vmatprep.subr.mxu0 0.0
    %1858 = vmatpush1.msra.mxu0 0.0
    %1859 = vmatprep.subr.mxu0 0.0
    %1860 = vmatpush1.msra.mxu0 0.0
    %1861 = vmatprep.subr.mxu0 0.0
    %1862 = vmatpush1.msra.mxu0 0.0
    %1863 = vmatprep.subr.mxu0 0.0
    %1864 = vmatpush1.msra.mxu0 0.0
    %1865 = vmatprep.subr.mxu0 0.0
    %1866 = vmatpush1.msra.mxu0 %v1531
    %1867 = vmatprep.subr.mxu0 0.0
    %1868 = vmatpush1.msra.mxu0 %v1530
    %1869 = vmatprep.subr.mxu0 0.0
    %1870 = vmatpush1.msra.mxu0 %v1529
    %1871 = vmatprep.subr.mxu0 0.0
    %1872 = vmatpush1.msra.mxu0 %v1528
    %1873 = vmatprep.subr.mxu0 0.0
    %1874 = vmatpush2.msra.mxu0 0.0
    %1875 = vmatprep.subr.mxu0 0.0
    %1876 = vmatpush2.msra.mxu0 0.0
    %1877 = vmatprep.subr.mxu0 0.0
    %1878 = vmatpush2.msra.mxu0 0.0
    %1879 = vmatprep.subr.mxu0 0.0
    %1880 = vmatpush2.msra.mxu0 0.0
    %1881 = vmatprep.subr.mxu0 0.0
    %1882 = vmatpush2.msra.mxu0 0.0
    %1883 = vmatprep.subr.mxu0 0.0
    %1884 = vmatpush2.msra.mxu0 0.0
    %1885 = vmatprep.subr.mxu0 0.0
    %1886 = vmatpush2.msra.mxu0 0.0
    %1887 = vmatprep.subr.mxu0 0.0
    %1888 = vmatpush2.msra.mxu0 0.0
    %1889 = vmatprep.subr.mxu0 0.0
    %1890 = vmatpush2.msra.mxu0 0.0
    %1891 = vmatprep.subr.mxu0 0.0
    %1892 = vmatpush2.msra.mxu0 0.0
    %1893 = vmatprep.subr.mxu0 0.0
    %1894 = vmatpush2.msra.mxu0 0.0
    %1895 = vmatprep.subr.mxu0 0.0
    %1896 = vmatpush2.msra.mxu0 0.0
    %1897 = vmatprep.subr.mxu0 0.0
    %1898 = vmatpush2.msra.mxu0 0.0
    %1899 = vmatprep.subr.mxu0 0.0
    %1900 = vmatpush2.msra.mxu0 0.0
    %1901 = vmatprep.subr.mxu0 0.0
    %1902 = vmatpush2.msra.mxu0 0.0
    %1903 = vmatprep.subr.mxu0 0.0
    %1904 = vmatpush2.msra.mxu0 0.0
    %1905 = vmatprep.mubr.f32.mxu0 0.0
    %1906 = vmatmul.mubr.f32.gmra.mxu0 %v1830
    %v1907 = vpop.f32.mrf.mxu0
    %v1908 = vadd.f32 %v1811, %v1907
    %v1909 = vpop.f32.mrf.mxu0
    %1910 = vmatprep.mubr.f32.mxu0 0.0
    %1911 = vmatmul.mubr.f32.gmra.mxu0 %v1833
    %v1912 = vpop.f32.mrf.mxu0
    %v1913 = vadd.f32 %v1816, %v1912
    %v1914 = vpop.f32.mrf.mxu0
    %1915 = vmatprep.mubr.f32.mxu0 0.0
    %1916 = vmatmul.mubr.f32.gmra.mxu0 %v1836
    %v1917 = vpop.f32.mrf.mxu0
    %v1918 = vadd.f32 %v1821, %v1917
    %v1919 = vpop.f32.mrf.mxu0
    %1920 = vmatprep.mubr.f32.mxu0 0.0
    %1921 = vmatmul.mubr.f32.gmra.mxu0 %v1839
    %v1922 = vpop.f32.mrf.mxu0
    %v1923 = vadd.f32 %v1826, %v1922
    %v1924 = vpop.f32.mrf.mxu0
    %1925 = vdwg.mxu0
    %v1926 = vsel %vm242, %v1714, 0.0
    %v1927 = vsel %vm242, %v1719, 0.0
    %v1928 = vadd.f32 %v1926, %v1927
    %v1929 = vsel %vm242, %v1724, 0.0
    %v1930 = vadd.f32 %v1928, %v1929
    %v1931 = vsel %vm242, %v1729, 0.0
    %v1932 = vadd.f32 %v1930, %v1931
    %v1933 = vsel %vm242, %v1908, 0.0
    %v1934 = vadd.f32 %v1932, %v1933
    %v1935 = vsel %vm242, %v1913, 0.0
    %v1936 = vadd.f32 %v1934, %v1935
    %v1937 = vsel %vm242, %v1918, 0.0
    %v1938 = vadd.f32 %v1936, %v1937
    %v1939 = vsel %vm242, %v1923, 0.0
    %v1940 = vadd.f32 %v1938, %v1939
    %v1941 = vrot.slane %v1940, 4
    %v1942 = vadd.f32 %v1940, %v1941
    %v1943 = vrot.slane %v1942, 2
    %v1944 = vadd.f32 %v1942, %v1943
    %v1945 = vrot.slane %v1944, 1
    %v1946 = vadd.f32 %v1944, %v1945
    %v1947 = vrcp.pop 64.0
    %v1948 = vmul.f32 %v1946, %v1947
    %v1949 = vsub.f32 %v1714, %v1948
    %v1950 = vsub.f32 %v1719, %v1948
    %v1951 = vsub.f32 %v1724, %v1948
    %v1952 = vsub.f32 %v1729, %v1948
    %v1953 = vsub.f32 %v1908, %v1948
    %v1954 = vsub.f32 %v1913, %v1948
    %v1955 = vsub.f32 %v1918, %v1948
    %v1956 = vsub.f32 %v1923, %v1948
    %v1957 = vmul.f32 %v1949, %v1949
    %v1958 = vmul.f32 %v1950, %v1950
    %v1959 = vmul.f32 %v1951, %v1951
    %v1960 = vmul.f32 %v1952, %v1952
    %v1961 = vmul.f32 %v1953, %v1953
    %v1962 = vmul.f32 %v1954, %v1954
    %v1963 = vmul.f32 %v1955, %v1955
    %v1964 = vmul.f32 %v1956, %v1956
    %v1965 = vsel %vm242, %v1957, 0.0
    %v1966 = vsel %vm242, %v1958, 0.0
    %v1967 = vadd.f32 %v1965, %v1966
    %v1968 = vsel %vm242, %v1959, 0.0
    %v1969 = vadd.f32 %v1967, %v1968
    %v1970 = vsel %vm242, %v1960, 0.0
    %v1971 = vadd.f32 %v1969, %v1970
    %v1972 = vsel %vm242, %v1961, 0.0
    %v1973 = vadd.f32 %v1971, %v1972
    %v1974 = vsel %vm242, %v1962, 0.0
    %v1975 = vadd.f32 %v1973, %v1974
    %v1976 = vsel %vm242, %v1963, 0.0
    %v1977 = vadd.f32 %v1975, %v1976
    %v1978 = vsel %vm242, %v1964, 0.0
    %v1979 = vadd.f32 %v1977, %v1978
    %v1980 = vrot.slane %v1979, 4
    %v1981 = vadd.f32 %v1979, %v1980
    %v1982 = vrot.slane %v1981, 2
    %v1983 = vadd.f32 %v1981, %v1982
    %v1984 = vrot.slane %v1983, 1
    %v1985 = vadd.f32 %v1983, %v1984
    %v1986 = vmul.f32 %v1985, %v1947
    %v1987 = vadd.f32 %v1986, 1e-05
    %v1988 = vrsqrt.pop %v1987
    %v1989 = vmul.f32 %v1949, %v1988
    %v1990 = vmul.f32 %v1950, %v1988
    %v1991 = vmul.f32 %v1951, %v1988
    %v1992 = vmul.f32 %v1952, %v1988
    %v1993 = vmul.f32 %v1953, %v1988
    %v1994 = vmul.f32 %v1954, %v1988
    %v1995 = vmul.f32 %v1955, %v1988
    %v1996 = vmul.f32 %v1956, %v1988
    %v1997 = vlaneseq
    %v1998 = vshrl.u32 %v1997, 7
    %v1999 = vsub.s32 0, %v1998
    %v2000 = vrot.slane %v1536, %v1999
    %v2001 = vmul.f32 %v2000, %v1989
    %v2002 = vmul.f32 %v2000, %v1990
    %v2003 = vmul.f32 %v2000, %v1991
    %v2004 = vmul.f32 %v2000, %v1992
    %v2005 = vmul.f32 %v2000, %v1993
    %v2006 = vmul.f32 %v2000, %v1994
    %v2007 = vmul.f32 %v2000, %v1995
    %v2008 = vmul.f32 %v2000, %v1996
    %v2009 = vlaneseq
    %v2010 = vshrl.u32 %v2009, 7
    %v2011 = vsub.s32 0, %v2010
    %v2012 = vrot.slane %v1537, %v2011
    %v2013 = vadd.f32 %v2001, %v2012
    %v2014 = vadd.f32 %v2002, %v2012
    %v2015 = vadd.f32 %v2003, %v2012
    %v2016 = vadd.f32 %v2004, %v2012
    %v2017 = vadd.f32 %v2005, %v2012
    %v2018 = vadd.f32 %v2006, %v2012
    %v2019 = vadd.f32 %v2007, %v2012
    %v2020 = vadd.f32 %v2008, %v2012
    %v2021 = vtanh.pop %v2013
    %v2022 = vtanh.pop %v2014
    %v2023 = vtanh.pop %v2015
    %v2024 = vtanh.pop %v2016
    %v2025 = vtanh.pop %v2017
    %v2026 = vtanh.pop %v2018
    %v2027 = vtanh.pop %v2019
    %v2028 = vtanh.pop %v2020
    %v2029 = vld [vmem:[%s1 + $0x70] sm:$0xff]
    %v2030 = vld [vmem:[%s1 + $0x78] sm:$0xff]
    %v2031 = vld [vmem:[%s1 + $0x80] sm:$0xff]
    %v2032 = vld [vmem:[%s1 + $0x88] sm:$0xff]
    %v2033 = vld [vmem:[%s1 + $0x90] sm:$0xff]
    %v2034 = vld [vmem:[%s1 + $0x98] sm:$0xff]
    %v2035 = vld [vmem:[%s1 + $0xa0] sm:$0xff]
    %v2036 = vld [vmem:[%s1 + $0xa8] sm:$0xff]
    %v2037 = vld [vmem:[%s1 + $0xf0] sm:$0x1]
    %v2038 = vld [vmem:[%s1 + $0xf8] sm:$0x1]
    %v2040 = vsel %vm242, %v2025, 0
    %v2043 = vsel %vm242, %v2026, 0
    %v2046 = vsel %vm242, %v2027, 0
    %v2049 = vsel %vm242, %v2028, 0
    %2051 = vmatprep.subr.mxu0 0.0
    %2052 = vmatpush1.msra.mxu0 0.0
    %2053 = vmatprep.subr.mxu0 0.0
    %2054 = vmatpush1.msra.mxu0 0.0
    %2055 = vmatprep.subr.mxu0 0.0
    %2056 = vmatpush1.msra.mxu0 0.0
    %2057 = vmatprep.subr.mxu0 0.0
    %2058 = vmatpush1.msra.mxu0 0.0
    %2059 = vmatprep.subr.mxu0 0.0
    %2060 = vmatpush1.msra.mxu0 0.0
    %2061 = vmatprep.subr.mxu0 0.0
    %2062 = vmatpush1.msra.mxu0 0.0
    %2063 = vmatprep.subr.mxu0 0.0
    %2064 = vmatpush1.msra.mxu0 0.0
    %2065 = vmatprep.subr.mxu0 0.0
    %2066 = vmatpush1.msra.mxu0 0.0
    %2067 = vmatprep.subr.mxu0 0.0
    %2068 = vmatpush1.msra.mxu0 0.0
    %2069 = vmatprep.subr.mxu0 0.0
    %2070 = vmatpush1.msra.mxu0 0.0
    %2071 = vmatprep.subr.mxu0 0.0
    %2072 = vmatpush1.msra.mxu0 0.0
    %2073 = vmatprep.subr.mxu0 0.0
    %2074 = vmatpush1.msra.mxu0 0.0
    %2075 = vmatprep.subr.mxu0 0.0
    %2076 = vmatpush1.msra.mxu0 %v2036
    %2077 = vmatprep.subr.mxu0 0.0
    %2078 = vmatpush1.msra.mxu0 %v2035
    %2079 = vmatprep.subr.mxu0 0.0
    %2080 = vmatpush1.msra.mxu0 %v2034
    %2081 = vmatprep.subr.mxu0 0.0
    %2082 = vmatpush1.msra.mxu0 %v2033
    %2083 = vmatprep.subr.mxu0 0.0
    %2084 = vmatpush2.msra.mxu0 0.0
    %2085 = vmatprep.subr.mxu0 0.0
    %2086 = vmatpush2.msra.mxu0 0.0
    %2087 = vmatprep.subr.mxu0 0.0
    %2088 = vmatpush2.msra.mxu0 0.0
    %2089 = vmatprep.subr.mxu0 0.0
    %2090 = vmatpush2.msra.mxu0 0.0
    %2091 = vmatprep.subr.mxu0 0.0
    %2092 = vmatpush2.msra.mxu0 0.0
    %2093 = vmatprep.subr.mxu0 0.0
    %2094 = vmatpush2.msra.mxu0 0.0
    %2095 = vmatprep.subr.mxu0 0.0
    %2096 = vmatpush2.msra.mxu0 0.0
    %2097 = vmatprep.subr.mxu0 0.0
    %2098 = vmatpush2.msra.mxu0 0.0
    %2099 = vmatprep.subr.mxu0 0.0
    %2100 = vmatpush2.msra.mxu0 0.0
    %2101 = vmatprep.subr.mxu0 0.0
    %2102 = vmatpush2.msra.mxu0 0.0
    %2103 = vmatprep.subr.mxu0 0.0
    %2104 = vmatpush2.msra.mxu0 0.0
    %2105 = vmatprep.subr.mxu0 0.0
    %2106 = vmatpush2.msra.mxu0 0.0
    %2107 = vmatprep.subr.mxu0 0.0
    %2108 = vmatpush2.msra.mxu0 0.0
    %2109 = vmatprep.subr.mxu0 0.0
    %2110 = vmatpush2.msra.mxu0 0.0
    %2111 = vmatprep.subr.mxu0 0.0
    %2112 = vmatpush2.msra.mxu0 0.0
    %2113 = vmatprep.subr.mxu0 0.0
    %2114 = vmatpush2.msra.mxu0 0.0
    %2115 = vmatprep.mubr.f32.mxu0 0.0
    %2116 = vmatmul.mubr.f32.gmra.mxu0 %v2040
    %v2117 = vpop.f32.mrf.mxu0
    %v2118 = vadd.f32 0.0, %v2117
    %v2119 = vpop.f32.mrf.mxu0
    %2120 = vmatprep.mubr.f32.mxu0 0.0
    %2121 = vmatmul.mubr.f32.gmra.mxu0 %v2043
    %v2122 = vpop.f32.mrf.mxu0
    %v2123 = vadd.f32 0.0, %v2122
    %v2124 = vpop.f32.mrf.mxu0
    %2125 = vmatprep.mubr.f32.mxu0 0.0
    %2126 = vmatmul.mubr.f32.gmra.mxu0 %v2046
    %v2127 = vpop.f32.mrf.mxu0
    %v2128 = vadd.f32 0.0, %v2127
    %v2129 = vpop.f32.mrf.mxu0
    %2130 = vmatprep.mubr.f32.mxu0 0.0
    %2131 = vmatmul.mubr.f32.gmra.mxu0 %v2049
    %v2132 = vpop.f32.mrf.mxu0
    %v2133 = vadd.f32 0.0, %v2132
    %v2134 = vpop.f32.mrf.mxu0
    %2135 = vdwg.mxu0
    %v2137 = vsel %vm242, %v2021, 0
    %v2140 = vsel %vm242, %v2022, 0
    %v2143 = vsel %vm242, %v2023, 0
    %v2146 = vsel %vm242, %v2024, 0
    %2148 = vmatprep.subr.mxu0 0.0
    %2149 = vmatpush1.msra.mxu0 0.0
    %2150 = vmatprep.subr.mxu0 0.0
    %2151 = vmatpush1.msra.mxu0 0.0
    %2152 = vmatprep.subr.mxu0 0.0
    %2153 = vmatpush1.msra.mxu0 0.0
    %2154 = vmatprep.subr.mxu0 0.0
    %2155 = vmatpush1.msra.mxu0 0.0
    %2156 = vmatprep.subr.mxu0 0.0
    %2157 = vmatpush1.msra.mxu0 0.0
    %2158 = vmatprep.subr.mxu0 0.0
    %2159 = vmatpush1.msra.mxu0 0.0
    %2160 = vmatprep.subr.mxu0 0.0
    %2161 = vmatpush1.msra.mxu0 0.0
    %2162 = vmatprep.subr.mxu0 0.0
    %2163 = vmatpush1.msra.mxu0 0.0
    %2164 = vmatprep.subr.mxu0 0.0
    %2165 = vmatpush1.msra.mxu0 0.0
    %2166 = vmatprep.subr.mxu0 0.0
    %2167 = vmatpush1.msra.mxu0 0.0
    %2168 = vmatprep.subr.mxu0 0.0
    %2169 = vmatpush1.msra.mxu0 0.0
    %2170 = vmatprep.subr.mxu0 0.0
    %2171 = vmatpush1.msra.mxu0 0.0
    %2172 = vmatprep.subr.mxu0 0.0
    %2173 = vmatpush1.msra.mxu0 %v2032
    %2174 = vmatprep.subr.mxu0 0.0
    %2175 = vmatpush1.msra.mxu0 %v2031
    %2176 = vmatprep.subr.mxu0 0.0
    %2177 = vmatpush1.msra.mxu0 %v2030
    %2178 = vmatprep.subr.mxu0 0.0
    %2179 = vmatpush1.msra.mxu0 %v2029
    %2180 = vmatprep.subr.mxu0 0.0
    %2181 = vmatpush2.msra.mxu0 0.0
    %2182 = vmatprep.subr.mxu0 0.0
    %2183 = vmatpush2.msra.mxu0 0.0
    %2184 = vmatprep.subr.mxu0 0.0
    %2185 = vmatpush2.msra.mxu0 0.0
    %2186 = vmatprep.subr.mxu0 0.0
    %2187 = vmatpush2.msra.mxu0 0.0
    %2188 = vmatprep.subr.mxu0 0.0
    %2189 = vmatpush2.msra.mxu0 0.0
    %2190 = vmatprep.subr.mxu0 0.0
    %2191 = vmatpush2.msra.mxu0 0.0
    %2192 = vmatprep.subr.mxu0 0.0
    %2193 = vmatpush2.msra.mxu0 0.0
    %2194 = vmatprep.subr.mxu0 0.0
    %2195 = vmatpush2.msra.mxu0 0.0
    %2196 = vmatprep.subr.mxu0 0.0
    %2197 = vmatpush2.msra.mxu0 0.0
    %2198 = vmatprep.subr.mxu0 0.0
    %2199 = vmatpush2.msra.mxu0 0.0
    %2200 = vmatprep.subr.mxu0 0.0
    %2201 = vmatpush2.msra.mxu0 0.0
    %2202 = vmatprep.subr.mxu0 0.0
    %2203 = vmatpush2.msra.mxu0 0.0
    %2204 = vmatprep.subr.mxu0 0.0
    %2205 = vmatpush2.msra.mxu0 0.0
    %2206 = vmatprep.subr.mxu0 0.0
    %2207 = vmatpush2.msra.mxu0 0.0
    %2208 = vmatprep.subr.mxu0 0.0
    %2209 = vmatpush2.msra.mxu0 0.0
    %2210 = vmatprep.subr.mxu0 0.0
    %2211 = vmatpush2.msra.mxu0 0.0
    %2212 = vmatprep.mubr.f32.mxu0 0.0
    %2213 = vmatmul.mubr.f32.gmra.mxu0 %v2137
    %v2214 = vpop.f32.mrf.mxu0
    %v2215 = vadd.f32 %v2118, %v2214
    %v2216 = vpop.f32.mrf.mxu0
    %2217 = vmatprep.mubr.f32.mxu0 0.0
    %2218 = vmatmul.mubr.f32.gmra.mxu0 %v2140
    %v2219 = vpop.f32.mrf.mxu0
    %v2220 = vadd.f32 %v2123, %v2219
    %v2221 = vpop.f32.mrf.mxu0
    %2222 = vmatprep.mubr.f32.mxu0 0.0
    %2223 = vmatmul.mubr.f32.gmra.mxu0 %v2143
    %v2224 = vpop.f32.mrf.mxu0
    %v2225 = vadd.f32 %v2128, %v2224
    %v2226 = vpop.f32.mrf.mxu0
    %2227 = vmatprep.mubr.f32.mxu0 0.0
    %2228 = vmatmul.mubr.f32.gmra.mxu0 %v2146
    %v2229 = vpop.f32.mrf.mxu0
    %v2230 = vadd.f32 %v2133, %v2229
    %v2231 = vpop.f32.mrf.mxu0
    %2232 = vdwg.mxu0
    %v2233 = vsel %vm242, %v2215, 0.0
    %v2234 = vsel %vm242, %v2220, 0.0
    %v2235 = vadd.f32 %v2233, %v2234
    %v2236 = vsel %vm242, %v2225, 0.0
    %v2237 = vadd.f32 %v2235, %v2236
    %v2238 = vsel %vm242, %v2230, 0.0
    %v2239 = vadd.f32 %v2237, %v2238
    %v2240 = vrot.slane %v2239, 4
    %v2241 = vadd.f32 %v2239, %v2240
    %v2242 = vrot.slane %v2241, 2
    %v2243 = vadd.f32 %v2241, %v2242
    %v2244 = vrot.slane %v2243, 1
    %v2245 = vadd.f32 %v2243, %v2244
    %v2246 = vrcp.pop 32.0
    %v2247 = vmul.f32 %v2245, %v2246
    %v2248 = vsub.f32 %v2215, %v2247
    %v2249 = vsub.f32 %v2220, %v2247
    %v2250 = vsub.f32 %v2225, %v2247
    %v2251 = vsub.f32 %v2230, %v2247
    %v2252 = vmul.f32 %v2248, %v2248
    %v2253 = vmul.f32 %v2249, %v2249
    %v2254 = vmul.f32 %v2250, %v2250
    %v2255 = vmul.f32 %v2251, %v2251
    %v2256 = vsel %vm242, %v2252, 0.0
    %v2257 = vsel %vm242, %v2253, 0.0
    %v2258 = vadd.f32 %v2256, %v2257
    %v2259 = vsel %vm242, %v2254, 0.0
    %v2260 = vadd.f32 %v2258, %v2259
    %v2261 = vsel %vm242, %v2255, 0.0
    %v2262 = vadd.f32 %v2260, %v2261
    %v2263 = vrot.slane %v2262, 4
    %v2264 = vadd.f32 %v2262, %v2263
    %v2265 = vrot.slane %v2264, 2
    %v2266 = vadd.f32 %v2264, %v2265
    %v2267 = vrot.slane %v2266, 1
    %v2268 = vadd.f32 %v2266, %v2267
    %v2269 = vmul.f32 %v2268, %v2246
    %v2270 = vadd.f32 %v2269, 1e-05
    %v2271 = vrsqrt.pop %v2270
    %v2272 = vmul.f32 %v2248, %v2271
    %v2273 = vmul.f32 %v2249, %v2271
    %v2274 = vmul.f32 %v2250, %v2271
    %v2275 = vmul.f32 %v2251, %v2271
    %v2276 = vlaneseq
    %v2277 = vshrl.u32 %v2276, 7
    %v2278 = vsub.s32 0, %v2277
    %v2279 = vrot.slane %v2037, %v2278
    %v2280 = vmul.f32 %v2279, %v2272
    %v2281 = vmul.f32 %v2279, %v2273
    %v2282 = vmul.f32 %v2279, %v2274
    %v2283 = vmul.f32 %v2279, %v2275
    %v2284 = vlaneseq
    %v2285 = vshrl.u32 %v2284, 7
    %v2286 = vsub.s32 0, %v2285
    %v2287 = vrot.slane %v2038, %v2286
    %v2288 = vadd.f32 %v2280, %v2287
    %v2289 = vadd.f32 %v2281, %v2287
    %v2290 = vadd.f32 %v2282, %v2287
    %v2291 = vadd.f32 %v2283, %v2287
    %v2292 = vtanh.pop %v2288
    %v2293 = vtanh.pop %v2289
    %v2294 = vtanh.pop %v2290
    %v2295 = vtanh.pop %v2291
    %v2296 = vld [vmem:[%s1 + $0xb0] sm:$0xff]
    %v2297 = vld [vmem:[%s1 + $0xb8] sm:$0xff]
    %v2298 = vld [vmem:[%s1 + $0xc0] sm:$0xff]
    %v2299 = vld [vmem:[%s1 + $0xc8] sm:$0xff]
    %v2300 = vld [vmem:[%s1 + $0x100] sm:$0x1]
    %v2301 = vlaneseq
    %v2302 = vshrl.u32 %v2301, 7
    %v2303 = vsub.s32 0, %v2302
    %v2304 = vrot.slane %v2300, %v2303
    %v2306 = vsel %vm242, %v2292, 0
    %v2309 = vsel %vm242, %v2293, 0
    %v2312 = vsel %vm242, %v2294, 0
    %v2315 = vsel %vm242, %v2295, 0
    %2317 = vmatprep.subr.mxu0 0.0
    %2318 = vmatpush1.msra.mxu0 0.0
    %2319 = vmatprep.subr.mxu0 0.0
    %2320 = vmatpush1.msra.mxu0 0.0
    %2321 = vmatprep.subr.mxu0 0.0
    %2322 = vmatpush1.msra.mxu0 0.0
    %2323 = vmatprep.subr.mxu0 0.0
    %2324 = vmatpush1.msra.mxu0 0.0
    %2325 = vmatprep.subr.mxu0 0.0
    %2326 = vmatpush1.msra.mxu0 0.0
    %2327 = vmatprep.subr.mxu0 0.0
    %2328 = vmatpush1.msra.mxu0 0.0
    %2329 = vmatprep.subr.mxu0 0.0
    %2330 = vmatpush1.msra.mxu0 0.0
    %2331 = vmatprep.subr.mxu0 0.0
    %2332 = vmatpush1.msra.mxu0 0.0
    %2333 = vmatprep.subr.mxu0 0.0
    %2334 = vmatpush1.msra.mxu0 0.0
    %2335 = vmatprep.subr.mxu0 0.0
    %2336 = vmatpush1.msra.mxu0 0.0
    %2337 = vmatprep.subr.mxu0 0.0
    %2338 = vmatpush1.msra.mxu0 0.0
    %2339 = vmatprep.subr.mxu0 0.0
    %2340 = vmatpush1.msra.mxu0 0.0
    %2341 = vmatprep.subr.mxu0 0.0
    %2342 = vmatpush1.msra.mxu0 %v2299
    %2343 = vmatprep.subr.mxu0 0.0
    %2344 = vmatpush1.msra.mxu0 %v2298
    %2345 = vmatprep.subr.mxu0 0.0
    %2346 = vmatpush1.msra.mxu0 %v2297
    %2347 = vmatprep.subr.mxu0 0.0
    %2348 = vmatpush1.msra.mxu0 %v2296
    %2349 = vmatprep.subr.mxu0 0.0
    %2350 = vmatpush2.msra.mxu0 0.0
    %2351 = vmatprep.subr.mxu0 0.0
    %2352 = vmatpush2.msra.mxu0 0.0
    %2353 = vmatprep.subr.mxu0 0.0
    %2354 = vmatpush2.msra.mxu0 0.0
    %2355 = vmatprep.subr.mxu0 0.0
    %2356 = vmatpush2.msra.mxu0 0.0
    %2357 = vmatprep.subr.mxu0 0.0
    %2358 = vmatpush2.msra.mxu0 0.0
    %2359 = vmatprep.subr.mxu0 0.0
    %2360 = vmatpush2.msra.mxu0 0.0
    %2361 = vmatprep.subr.mxu0 0.0
    %2362 = vmatpush2.msra.mxu0 0.0
    %2363 = vmatprep.subr.mxu0 0.0
    %2364 = vmatpush2.msra.mxu0 0.0
    %2365 = vmatprep.subr.mxu0 0.0
    %2366 = vmatpush2.msra.mxu0 0.0
    %2367 = vmatprep.subr.mxu0 0.0
    %2368 = vmatpush2.msra.mxu0 0.0
    %2369 = vmatprep.subr.mxu0 0.0
    %2370 = vmatpush2.msra.mxu0 0.0
    %2371 = vmatprep.subr.mxu0 0.0
    %2372 = vmatpush2.msra.mxu0 0.0
    %2373 = vmatprep.subr.mxu0 0.0
    %2374 = vmatpush2.msra.mxu0 0.0
    %2375 = vmatprep.subr.mxu0 0.0
    %2376 = vmatpush2.msra.mxu0 0.0
    %2377 = vmatprep.subr.mxu0 0.0
    %2378 = vmatpush2.msra.mxu0 0.0
    %2379 = vmatprep.subr.mxu0 0.0
    %2380 = vmatpush2.msra.mxu0 0.0
    %2381 = vmatprep.mubr.f32.mxu0 0.0
    %2382 = vmatmul.mubr.f32.gmra.mxu0 %v2306
    %v2383 = vpop.f32.mrf.mxu0
    %v2384 = vadd.f32 %v2304, %v2383
    %v2385 = vpop.f32.mrf.mxu0
    %2386 = vmatprep.mubr.f32.mxu0 0.0
    %2387 = vmatmul.mubr.f32.gmra.mxu0 %v2309
    %v2388 = vpop.f32.mrf.mxu0
    %v2389 = vadd.f32 %v2304, %v2388
    %v2390 = vpop.f32.mrf.mxu0
    %2391 = vmatprep.mubr.f32.mxu0 0.0
    %2392 = vmatmul.mubr.f32.gmra.mxu0 %v2312
    %v2393 = vpop.f32.mrf.mxu0
    %v2394 = vadd.f32 %v2304, %v2393
    %v2395 = vpop.f32.mrf.mxu0
    %2396 = vmatprep.mubr.f32.mxu0 0.0
    %2397 = vmatmul.mubr.f32.gmra.mxu0 %v2315
    %v2398 = vpop.f32.mrf.mxu0
    %v2399 = vadd.f32 %v2304, %v2398
    %v2400 = vpop.f32.mrf.mxu0
    %2401 = vdwg.mxu0
    %2402 = vst [vmem:[#allocation2] sm:$0xff] %v2384
    %2403 = vst [vmem:[#allocation2 + $0x8] sm:$0xff] %v2389
    %2404 = vst [vmem:[#allocation2 + $0x10] sm:$0xff] %v2394
    %2405 = vst [vmem:[#allocation2 + $0x18] sm:$0xff] %v2399
    // Predicated region
    $region10: #{_lambda_.1} parent=1 // pred_check
      _
    $region11: #{_lambda_.1} parent=1 // pred_check_branch
      %2407 = sbr.rel (0) target = $region13
    $region12: #{_lambda_.1} parent=1 // pred_region
      %s2409 = ssub.s32 512, 512
      %2410 = vsyncadd [#allocation3], %s2409
      %s2411 = sshll.u32 [#allocation2], 4
      %s2412 = int_to_ptr.vmem [resolvable:$true] %s2411
      %2417 = dma.vmem_to_hbm [thread:$0]  %s2412, 512, %s2, [#allocation3], 128, 128, 8
    $region13: #{_lambda_.1} parent=1 // pred_fallthru
      _
    // Predicated region
    $region14: #{_lambda_.1} parent=1 // pred_check
      _
    $region15: #{_lambda_.1} parent=1 // pred_check_branch
      %2419 = sbr.rel (0) target = $region17
    $region16: #{_lambda_.1} parent=1 // pred_region
      %2420 = dma.done [#allocation3], 512
    $region17: #{_lambda_.1} parent=1 // pred_fallthru
      _
    %2421 = vsyncpa [#allocation3], 1

</llo_original>
